<compile_context>
chip_gen: v7x
topology: tpu7x:2x2x1
jax: 0.10.0
libtpu: 0.0.40
codegen_flags: <defaults>
</compile_context>

<pallas_src>
import math

import jax
import jax.numpy as jnp
from jax import lax
from jax.experimental import pallas as pl
from jax.experimental.pallas import tpu as pltpu


_TAPS = [(dy, dx) for dy in (-1, 0, 1) for dx in (-1, 0, 1)]  # tap t = (dy+1)*3+(dx+1)


# -----------------------------------------------------------------------------
# Kernel
# -----------------------------------------------------------------------------
def _make_kernel(H, W, Cin, Cout, normalize, downsample, learned_sc, slope, eps):
    Hd, Wd = (H // 2, W // 2) if downsample else (H, W)
    HW, HdWd = H * W, Hd * Wd
    inv_sqrt2 = 1.0 / math.sqrt(2.0)

    def leaky(v):  # LeakyReLU(0.2): max(v, slope*v) -- 2 VPU ops
        return jnp.maximum(v, slope * v)

    def inorm(v, w, b):
        # InstanceNorm2d(affine=True), biased variance, eps=1e-5.
        # Two-pass statistics (subtract mean first) -- avoids catastrophic
        # cancellation of the one-pass E[x^2]-E[x]^2 form.
        n = v.shape[1]
        mean = jnp.sum(v, axis=1, keepdims=True) * (1.0 / n)
        d = v - mean
        var = jnp.sum(d * d, axis=1, keepdims=True) * (1.0 / n)
        scale = w * lax.rsqrt(var + eps)          # rsqrt -> EUP slot (free-ish)
        return d * scale + b

    def tap_masks(h, w):
        # Boundary-validity masks for the 9 taps; position-only -> shape (1, hw)
        # and broadcast along sublanes inside jnp.where.
        hw = h * w
        pos = lax.broadcasted_iota(jnp.int32, (1, hw), 1)
        col = pos % w
        masks = []
        for dy, dx in _TAPS:
            conds = []
            if dx == -1:
                conds.append(col > 0)
            elif dx == 1:
                conds.append(col < w - 1)
            if dy == -1:
                conds.append(pos >= w)
            elif dy == 1:
                conds.append(pos < (h - 1) * w)
            m = None
            for c in conds:
                m = c if m is None else jnp.logical_and(m, c)
            masks.append(m)
        return masks

    def im2col(v, masks, h, w):
        # (Cin, hw) f32 -> (9*Cin, hw) bf16 patch matrix via XLU rolls + masks.
        # Select in f32 (v5e has no bf16 VALU), cast each piece to bf16 before
        # the concatenate so the 9x-expanded buffer is half-width.
        hw = h * w
        pieces = []
        for (dy, dx), m in zip(_TAPS, masks):
            off = dy * w + dx
            shifted = v if off == 0 else pltpu.roll(v, (-off) % hw, 1)
            if m is not None:
                shifted = jnp.where(m, shifted, 0.0)
            pieces.append(shifted.astype(jnp.bfloat16))
        return jnp.concatenate(pieces, axis=0)

    def conv(patches, w_ref, b_ref):
        # single MXU matmul, K = 9*Cin, bf16 operands, f32 accumulation
        return jnp.dot(w_ref[...], patches,
                       preferred_element_type=jnp.float32) + b_ref[...]

    def pool(v, sw_ref):
        # 2x2 / stride-2 average pool on a flat (C, HW) map, no (HW, HdWd) matrix:
        #   a[p] = v[p] + v[p + W]            (one lane roll + add; XLU + VPU)
        #   row i of the output = a[:, 2*i*W : 2*i*W + W] @ Sw   (K = W)
        # where Sw (W, Wd) holds exact 0.25 at rows {2j, 2j+1} of column j, so the
        # tiny matmul both averages horizontal pairs and compacts to Wd lanes.
        a = v + pltpu.roll(v, HW - W, 1)
        sw = sw_ref[...]
        rows = []
        for i in range(Hd):
            blk = a[:, 2 * i * W:(2 * i + 1) * W].astype(sw.dtype)
            rows.append(jnp.dot(blk, sw, preferred_element_type=jnp.float32))
        return jnp.concatenate(rows, axis=1)          # (C, Hd*Wd) f32

    def kernel(*refs):
        it = iter(refs)
        x_ref = next(it)
        w1_ref = next(it); b1_ref = next(it)
        w2_ref = next(it); b2_ref = next(it)
        if normalize:
            n1w = next(it); n1b = next(it); n2w = next(it); n2b = next(it)
        scw_ref = next(it) if learned_sc else None
        sw_ref = next(it) if downsample else None
        out_ref = next(it)

        masks1 = tap_masks(H, W)
        masks2 = masks1 if not downsample else tap_masks(Hd, Wd)

        x = x_ref[0]                                  # (Cin, HW) f32, spatial on lanes

        # ---------------- shortcut path ----------------
        # pool first, 1x1 after (both linear): 1x1 runs on HdWd columns and the
        # pool on Cin rows -> 2-4x fewer shortcut FLOPs, identical math.
        s = pool(x, sw_ref) if downsample else x
        if learned_sc:
            s = jnp.dot(scw_ref[...], s.astype(scw_ref.dtype),
                        preferred_element_type=jnp.float32)          # (Cout, HdWd)

        # ---------------- residual path -----------------
        r = x
        if normalize:
            r = inorm(r, n1w[...], n1b[...])
        r = leaky(r)
        r = conv(im2col(r, masks1, H, W), w1_ref, b1_ref)            # (Cin, HW)
        if downsample:
            r = pool(r, sw_ref)                                      # (Cin, HdWd)
        if normalize:
            r = inorm(r, n2w[...], n2b[...])
        r = leaky(r)
        r = conv(im2col(r, masks2, Hd, Wd), w2_ref, b2_ref)          # (Cout, HdWd)

        out_ref[0] = ((s + r) * inv_sqrt2).astype(out_ref.dtype)

    return kernel


def _const_spec(arr):
    nd = arr.ndim
    return pl.BlockSpec(arr.shape, lambda n, _nd=nd: (0,) * _nd)


# -----------------------------------------------------------------------------
# Wrapper (layout + parameter packing)
# -----------------------------------------------------------------------------
def residual_block_forward(x_nchw, params, *, normalize, downsample,
                           slope=0.2, eps=1e-5, out_dtype=None):
    N, Cin, H, W = x_nchw.shape
    Cout = params["conv2_w"].shape[0]
    learned_sc = Cin != Cout
    if downsample:
        assert H % 2 == 0 and W % 2 == 0, "downsample requires even H and W"
    Hd, Wd = (H // 2, W // 2) if downsample else (H, W)
    HW, HdWd = H * W, Hd * Wd
    out_dtype = x_nchw.dtype if out_dtype is None else out_dtype   # bf16 supported

    # channels-on-sublanes / spatial-on-lanes: a pure reshape, no transpose
    x_flat = x_nchw.reshape(N, Cin, HW).astype(jnp.float32)

    # all MXU operands in bf16 (f32 accumulation) regardless of channel count
    mat_dtype = jnp.bfloat16

    def to_slab(w):  # torch (O, I, 3, 3) -> (O, 9*I), column index = (ky*3+kx)*I + i
        return jnp.transpose(w, (0, 2, 3, 1)).reshape(w.shape[0], 9 * w.shape[1]) \
                  .astype(mat_dtype)

    inputs = [x_flat,
              to_slab(params["conv1_w"]),
              params["conv1_b"].reshape(-1, 1).astype(jnp.float32),
              to_slab(params["conv2_w"]),
              params["conv2_b"].reshape(-1, 1).astype(jnp.float32)]
    if normalize:
        inputs += [params["n1_w"].reshape(-1, 1).astype(jnp.float32),
                   params["n1_b"].reshape(-1, 1).astype(jnp.float32),
                   params["n2_w"].reshape(-1, 1).astype(jnp.float32),
                   params["n2_b"].reshape(-1, 1).astype(jnp.float32)]
    if learned_sc:
        inputs += [params["sc_w"][:, :, 0, 0].astype(mat_dtype)]     # (Cout, Cin)
    if downsample:
        # (W, Wd) horizontal averaging / lane-compaction matrix; 0.25 is exact in bf16
        w_idx = jnp.arange(W)[:, None]
        j_idx = jnp.arange(Wd)[None, :]
        sw = ((w_idx // 2) == j_idx).astype(jnp.float32) * 0.25
        inputs += [sw.astype(mat_dtype)]

    # one sample per grid step: bounded live ranges; >=2 grid steps for N>=2
    in_specs = [pl.BlockSpec((1, Cin, HW), lambda n: (n, 0, 0))]
    in_specs += [_const_spec(a) for a in inputs[1:]]

    kernel = _make_kernel(H, W, Cin, Cout, normalize, downsample, learned_sc,
                          slope, eps)

    # ---- VMEM budget: blocks (double-buffered) + params (double-buffered by the
    # pipeline) + the dominant in-kernel intermediates, capped below physical ----
    x_blk = Cin * HW * 4
    out_blk = Cout * HdWd * jnp.dtype(out_dtype).itemsize
    param_bytes = sum(int(a.size) * a.dtype.itemsize for a in inputs[1:])
    work_bytes = 2 * (9 * Cin * HW * 2) + 8 * max(Cin, Cout) * HW * 4
    need = 2 * (x_blk + out_blk + param_bytes) + work_bytes
    try:
        phys = int(pltpu.get_tpu_info().vmem_capacity_bytes)
    except Exception:
        phys = 128 * 2**20
    vmem_limit = min(int(0.75 * phys), max(32 * 2**20, 2 * need))

    grid_spec = pltpu.PrefetchScalarGridSpec(
        num_scalar_prefetch=0,
        grid=(N,),
        in_specs=in_specs,
        out_specs=pl.BlockSpec((1, Cout, HdWd), lambda n: (n, 0, 0)),
    )

    out = pl.pallas_call(
        kernel,
        out_shape=jax.ShapeDtypeStruct((N, Cout, HdWd), out_dtype),
        grid_spec=grid_spec,
        compiler_params=pltpu.CompilerParams(
            dimension_semantics=("parallel",),       # samples are independent
            vmem_limit_bytes=vmem_limit),
    )(*inputs)

    # (N, Cout, Hd*Wd) -> NCHW: again just a reshape
    return out.reshape(N, Cout, Hd, Wd)


# -----------------------------------------------------------------------------
# Deterministic parameter init (shapes follow ResidualBlock._build_weights)
# -----------------------------------------------------------------------------
def init_params(key, Cin, Cout, normalize):
    ks = jax.random.split(key, 9)
    p = {
        "conv1_w": 0.1 * jax.random.normal(ks[0], (Cin, Cin, 3, 3), jnp.float32),
        "conv1_b": 0.1 * jax.random.normal(ks[1], (Cin,), jnp.float32),
        "conv2_w": 0.1 * jax.random.normal(ks[2], (Cout, Cin, 3, 3), jnp.float32),
        "conv2_b": 0.1 * jax.random.normal(ks[3], (Cout,), jnp.float32),
    }
    if normalize:
        p["n1_w"] = 1.0 + 0.1 * jax.random.normal(ks[4], (Cin,), jnp.float32)
        p["n1_b"] = 0.1 * jax.random.normal(ks[5], (Cin,), jnp.float32)
        p["n2_w"] = 1.0 + 0.1 * jax.random.normal(ks[6], (Cin,), jnp.float32)
        p["n2_b"] = 0.1 * jax.random.normal(ks[7], (Cin,), jnp.float32)
    if Cin != Cout:
        p["sc_w"] = 0.1 * jax.random.normal(ks[8], (Cout, Cin, 1, 1), jnp.float32)
    return p


# -----------------------------------------------------------------------------
# Pure-JAX reference (mirrors the PyTorch forward exactly) for validation
# -----------------------------------------------------------------------------
def reference_forward(x, params, *, normalize, downsample, slope=0.2, eps=1e-5):
    Cin = x.shape[1]
    Cout = params["conv2_w"].shape[0]
    learned_sc = Cin != Cout
    prec = lax.Precision.HIGHEST

    def conv(v, w, b=None, pad=0):
        y = lax.conv_general_dilated(v, w, window_strides=(1, 1),
                                     padding=[(pad, pad), (pad, pad)],
                                     dimension_numbers=("NCHW", "OIHW", "NCHW"),
                                     precision=prec)
        return y if b is None else y + b[None, :, None, None]

    def inorm(v, w, b):
        m = v.mean(axis=(2, 3), keepdims=True)
        var = ((v - m) ** 2).mean(axis=(2, 3), keepdims=True)
        return (v - m) / jnp.sqrt(var + eps) * w[None, :, None, None] + b[None, :, None, None]

    def leaky(v):
        return jnp.where(v >= 0, v, slope * v)

    def pool(v):
        n, c, h, w = v.shape
        return v.reshape(n, c, h // 2, 2, w // 2, 2).mean(axis=(3, 5))

    s = x
    if learned_sc:
        s = conv(s, params["sc_w"], None, pad=0)
    if downsample:
        s = pool(s)

    r = x
    if normalize:
        r = inorm(r, params["n1_w"], params["n1_b"])
    r = leaky(r)
    r = conv(r, params["conv1_w"], params["conv1_b"], pad=1)
    if downsample:
        r = pool(r)
    if normalize:
        r = inorm(r, params["n2_w"], params["n2_b"])
    r = leaky(r)
    r = conv(r, params["conv2_w"], params["conv2_b"], pad=1)
    return (s + r) / math.sqrt(2.0)


# -----------------------------------------------------------------------------
if __name__ == "__main__":
    key = jax.random.PRNGKey(0)
    # tolerance reflects bf16 MXU operands (f32 accumulation) vs. an f32 reference
    RTOL, ATOL = 3e-2, 3e-2

    # Config 1: normalize + downsample + learned shortcut (dim_in != dim_out)
    N, Cin, Cout, H, W = 2, 4, 8, 16, 16
    kx, kp = jax.random.split(key)
    x = jax.random.normal(kx, (N, Cin, H, W), jnp.float32)
    params = init_params(kp, Cin, Cout, True)
    out = jax.block_until_ready(
        residual_block_forward(x, params, normalize=True, downsample=True))
    ref = reference_forward(x, params, normalize=True, downsample=True)
    assert out.shape == (N, Cout, H // 2, W // 2), out.shape
    assert jnp.allclose(out, ref, rtol=RTOL, atol=ATOL), \
        f"max abs err = {float(jnp.max(jnp.abs(out - ref)))}"

    # Config 2: plain block (no norm / no downsample / identity shortcut)
    kx2, kp2 = jax.random.split(kp)
    x2 = jax.random.normal(kx2, (N, Cin, H, W), jnp.float32)
    params2 = init_params(kp2, Cin, Cin, False)
    out2 = jax.block_until_ready(
        residual_block_forward(x2, params2, normalize=False, downsample=False))
    ref2 = reference_forward(x2, params2, normalize=False, downsample=False)
    assert out2.shape == (N, Cin, H, W), out2.shape
    assert jnp.allclose(out2, ref2, rtol=RTOL, atol=ATOL), \
        f"max abs err = {float(jnp.max(jnp.abs(out2 - ref2)))}"

    print("KERNEL_OK")
</pallas_src>

<mosaic_0001>
module attributes {stable_mosaic.version = 11 : i64} {
  func.func @kernel(%arg0: i32, %arg1: memref<1x4x256xf32, #tpu.memory_space<vmem>>, %arg2: memref<4x36xbf16, #tpu.memory_space<vmem>>, %arg3: memref<4x1xf32, #tpu.memory_space<vmem>>, %arg4: memref<8x36xbf16, #tpu.memory_space<vmem>>, %arg5: memref<8x1xf32, #tpu.memory_space<vmem>>, %arg6: memref<4x1xf32, #tpu.memory_space<vmem>>, %arg7: memref<4x1xf32, #tpu.memory_space<vmem>>, %arg8: memref<4x1xf32, #tpu.memory_space<vmem>>, %arg9: memref<4x1xf32, #tpu.memory_space<vmem>>, %arg10: memref<8x4xbf16, #tpu.memory_space<vmem>>, %arg11: memref<16x8xbf16, #tpu.memory_space<vmem>>, %arg12: memref<1x8x64xf32, #tpu.memory_space<vmem>>) attributes {dimension_semantics = [#tpu.dimension_semantics<parallel>], iteration_bounds = array<i64: 2>, scalar_prefetch = 0 : i64, scratch_operands = 0 : i64, tpu.core_type = #tpu.core_type<tc>, window_params = [{transform_indices = @transform_0, window_bounds = array<i64: 1, 4, 256>}, {pipeline_mode = #tpu.pipeline_mode<synchronous>, transform_indices = @transform_1, window_bounds = array<i64: 4, 36>}, {pipeline_mode = #tpu.pipeline_mode<synchronous>, transform_indices = @transform_2, window_bounds = array<i64: 4, 1>}, {pipeline_mode = #tpu.pipeline_mode<synchronous>, transform_indices = @transform_3, window_bounds = array<i64: 8, 36>}, {pipeline_mode = #tpu.pipeline_mode<synchronous>, transform_indices = @transform_4, window_bounds = array<i64: 8, 1>}, {pipeline_mode = #tpu.pipeline_mode<synchronous>, transform_indices = @transform_5, window_bounds = array<i64: 4, 1>}, {pipeline_mode = #tpu.pipeline_mode<synchronous>, transform_indices = @transform_6, window_bounds = array<i64: 4, 1>}, {pipeline_mode = #tpu.pipeline_mode<synchronous>, transform_indices = @transform_7, window_bounds = array<i64: 4, 1>}, {pipeline_mode = #tpu.pipeline_mode<synchronous>, transform_indices = @transform_8, window_bounds = array<i64: 4, 1>}, {pipeline_mode = #tpu.pipeline_mode<synchronous>, transform_indices = @transform_9, window_bounds = array<i64: 8, 4>}, {pipeline_mode = #tpu.pipeline_mode<synchronous>, transform_indices = @transform_10, window_bounds = array<i64: 16, 8>}, {transform_indices = @transform_11, window_bounds = array<i64: 1, 8, 64>}]} {
    %0 = tpu.iota {dimensions = array<i32: 1>} : vector<1x256xi32>
    %c16_i32 = arith.constant 16 : i32
    %c0_i32 = arith.constant 0 : i32
    %1 = arith.cmpi eq, %c16_i32, %c0_i32 : i32
    %c1_i32 = arith.constant 1 : i32
    %2 = arith.select %1, %c1_i32, %c16_i32 : i32
    %3 = vector.broadcast %2 : i32 to vector<1x256xi32>
    %4 = arith.remsi %0, %3 : vector<1x256xi32>
    %c0_i32_0 = arith.constant 0 : i32
    %5 = vector.broadcast %c0_i32_0 : i32 to vector<1x256xi32>
    %6 = arith.cmpi ne, %4, %5 : vector<1x256xi32>
    %c0_i32_1 = arith.constant 0 : i32
    %7 = vector.broadcast %c0_i32_1 : i32 to vector<1x256xi32>
    %8 = arith.cmpi slt, %4, %7 : vector<1x256xi32>
    %c0_i32_2 = arith.constant 0 : i32
    %9 = arith.cmpi slt, %2, %c0_i32_2 : i32
    %10 = vector.broadcast %9 : i1 to vector<1x256xi1>
    %11 = vector.broadcast %10 : vector<1x256xi1> to vector<1x256xi1>
    %12 = arith.xori %8, %11 : vector<1x256xi1>
    %13 = arith.andi %12, %6 : vector<1x256xi1>
    %14 = vector.broadcast %2 : i32 to vector<1x256xi32>
    %15 = arith.addi %4, %14 : vector<1x256xi32>
    %16 = arith.select %13, %15, %4 : vector<1x256xi1>, vector<1x256xi32>
    %c0_i32_3 = arith.constant 0 : i32
    %17 = vector.broadcast %c0_i32_3 : i32 to vector<1x256xi32>
    %18 = arith.cmpi sgt, %16, %17 : vector<1x256xi32>
    %c16_i32_4 = arith.constant 16 : i32
    %19 = vector.broadcast %c16_i32_4 : i32 to vector<1x256xi32>
    %20 = arith.cmpi sge, %0, %19 : vector<1x256xi32>
    %21 = arith.andi %18, %20 : vector<1x256xi1>
    %c16_i32_5 = arith.constant 16 : i32
    %22 = vector.broadcast %c16_i32_5 : i32 to vector<1x256xi32>
    %23 = arith.cmpi sge, %0, %22 : vector<1x256xi32>
    %c15_i32 = arith.constant 15 : i32
    %24 = vector.broadcast %c15_i32 : i32 to vector<1x256xi32>
    %25 = arith.cmpi slt, %16, %24 : vector<1x256xi32>
    %c16_i32_6 = arith.constant 16 : i32
    %26 = vector.broadcast %c16_i32_6 : i32 to vector<1x256xi32>
    %27 = arith.cmpi sge, %0, %26 : vector<1x256xi32>
    %28 = arith.andi %25, %27 : vector<1x256xi1>
    %c0_i32_7 = arith.constant 0 : i32
    %29 = vector.broadcast %c0_i32_7 : i32 to vector<1x256xi32>
    %30 = arith.cmpi sgt, %16, %29 : vector<1x256xi32>
    %c15_i32_8 = arith.constant 15 : i32
    %31 = vector.broadcast %c15_i32_8 : i32 to vector<1x256xi32>
    %32 = arith.cmpi slt, %16, %31 : vector<1x256xi32>
    %c0_i32_9 = arith.constant 0 : i32
    %33 = vector.broadcast %c0_i32_9 : i32 to vector<1x256xi32>
    %34 = arith.cmpi sgt, %16, %33 : vector<1x256xi32>
    %c240_i32 = arith.constant 240 : i32
    %35 = vector.broadcast %c240_i32 : i32 to vector<1x256xi32>
    %36 = arith.cmpi slt, %0, %35 : vector<1x256xi32>
    %37 = arith.andi %34, %36 : vector<1x256xi1>
    %c240_i32_10 = arith.constant 240 : i32
    %38 = vector.broadcast %c240_i32_10 : i32 to vector<1x256xi32>
    %39 = arith.cmpi slt, %0, %38 : vector<1x256xi32>
    %c15_i32_11 = arith.constant 15 : i32
    %40 = vector.broadcast %c15_i32_11 : i32 to vector<1x256xi32>
    %41 = arith.cmpi slt, %16, %40 : vector<1x256xi32>
    %c240_i32_12 = arith.constant 240 : i32
    %42 = vector.broadcast %c240_i32_12 : i32 to vector<1x256xi32>
    %43 = arith.cmpi slt, %0, %42 : vector<1x256xi32>
    %44 = arith.andi %41, %43 : vector<1x256xi1>
    %45 = tpu.iota {dimensions = array<i32: 1>} : vector<1x64xi32>
    %c8_i32 = arith.constant 8 : i32
    %c0_i32_13 = arith.constant 0 : i32
    %46 = arith.cmpi eq, %c8_i32, %c0_i32_13 : i32
    %c1_i32_14 = arith.constant 1 : i32
    %47 = arith.select %46, %c1_i32_14, %c8_i32 : i32
    %48 = vector.broadcast %47 : i32 to vector<1x64xi32>
    %49 = arith.remsi %45, %48 : vector<1x64xi32>
    %c0_i32_15 = arith.constant 0 : i32
    %50 = vector.broadcast %c0_i32_15 : i32 to vector<1x64xi32>
    %51 = arith.cmpi ne, %49, %50 : vector<1x64xi32>
    %c0_i32_16 = arith.constant 0 : i32
    %52 = vector.broadcast %c0_i32_16 : i32 to vector<1x64xi32>
    %53 = arith.cmpi slt, %49, %52 : vector<1x64xi32>
    %c0_i32_17 = arith.constant 0 : i32
    %54 = arith.cmpi slt, %47, %c0_i32_17 : i32
    %55 = vector.broadcast %54 : i1 to vector<1x64xi1>
    %56 = vector.broadcast %55 : vector<1x64xi1> to vector<1x64xi1>
    %57 = arith.xori %53, %56 : vector<1x64xi1>
    %58 = arith.andi %57, %51 : vector<1x64xi1>
    %59 = vector.broadcast %47 : i32 to vector<1x64xi32>
    %60 = arith.addi %49, %59 : vector<1x64xi32>
    %61 = arith.select %58, %60, %49 : vector<1x64xi1>, vector<1x64xi32>
    %c0_i32_18 = arith.constant 0 : i32
    %62 = vector.broadcast %c0_i32_18 : i32 to vector<1x64xi32>
    %63 = arith.cmpi sgt, %61, %62 : vector<1x64xi32>
    %c8_i32_19 = arith.constant 8 : i32
    %64 = vector.broadcast %c8_i32_19 : i32 to vector<1x64xi32>
    %65 = arith.cmpi sge, %45, %64 : vector<1x64xi32>
    %66 = arith.andi %63, %65 : vector<1x64xi1>
    %c8_i32_20 = arith.constant 8 : i32
    %67 = vector.broadcast %c8_i32_20 : i32 to vector<1x64xi32>
    %68 = arith.cmpi sge, %45, %67 : vector<1x64xi32>
    %c7_i32 = arith.constant 7 : i32
    %69 = vector.broadcast %c7_i32 : i32 to vector<1x64xi32>
    %70 = arith.cmpi slt, %61, %69 : vector<1x64xi32>
    %c8_i32_21 = arith.constant 8 : i32
    %71 = vector.broadcast %c8_i32_21 : i32 to vector<1x64xi32>
    %72 = arith.cmpi sge, %45, %71 : vector<1x64xi32>
    %73 = arith.andi %70, %72 : vector<1x64xi1>
    %c0_i32_22 = arith.constant 0 : i32
    %74 = vector.broadcast %c0_i32_22 : i32 to vector<1x64xi32>
    %75 = arith.cmpi sgt, %61, %74 : vector<1x64xi32>
    %c7_i32_23 = arith.constant 7 : i32
    %76 = vector.broadcast %c7_i32_23 : i32 to vector<1x64xi32>
    %77 = arith.cmpi slt, %61, %76 : vector<1x64xi32>
    %c0_i32_24 = arith.constant 0 : i32
    %78 = vector.broadcast %c0_i32_24 : i32 to vector<1x64xi32>
    %79 = arith.cmpi sgt, %61, %78 : vector<1x64xi32>
    %c56_i32 = arith.constant 56 : i32
    %80 = vector.broadcast %c56_i32 : i32 to vector<1x64xi32>
    %81 = arith.cmpi slt, %45, %80 : vector<1x64xi32>
    %82 = arith.andi %79, %81 : vector<1x64xi1>
    %c56_i32_25 = arith.constant 56 : i32
    %83 = vector.broadcast %c56_i32_25 : i32 to vector<1x64xi32>
    %84 = arith.cmpi slt, %45, %83 : vector<1x64xi32>
    %c7_i32_26 = arith.constant 7 : i32
    %85 = vector.broadcast %c7_i32_26 : i32 to vector<1x64xi32>
    %86 = arith.cmpi slt, %61, %85 : vector<1x64xi32>
    %c56_i32_27 = arith.constant 56 : i32
    %87 = vector.broadcast %c56_i32_27 : i32 to vector<1x64xi32>
    %88 = arith.cmpi slt, %45, %87 : vector<1x64xi32>
    %89 = arith.andi %86, %88 : vector<1x64xi1>
    %c0 = arith.constant 0 : index
    %c0_28 = arith.constant 0 : index
    %c0_29 = arith.constant 0 : index
    %90 = vector.load %arg1[%c0, %c0_28, %c0_29] : memref<1x4x256xf32, #tpu.memory_space<vmem>>, vector<1x4x256xf32>
    %91 = vector.shape_cast %90 : vector<1x4x256xf32> to vector<4x256xf32>
    %c240_i32_30 = arith.constant 240 : i32
    %92 = tpu.dynamic_rotate %91 by %c240_i32_30 dim 1 : vector<4x256xf32>, i32 -> vector<4x256xf32>
    %93 = arith.addf %91, %92 : vector<4x256xf32>
    %c0_31 = arith.constant 0 : index
    %c0_32 = arith.constant 0 : index
    %94 = vector.load %arg11[%c0_31, %c0_32] : memref<16x8xbf16, #tpu.memory_space<vmem>>, vector<16x8xbf16>
    %95 = vector.extract_strided_slice %93 {offsets = [0, 0], sizes = [4, 16], strides = [1, 1]} : vector<4x256xf32> to vector<4x16xf32>
    %96 = arith.truncf %95 : vector<4x16xf32> to vector<4x16xbf16>
    %cst = arith.constant dense<0.000000e+00> : vector<4x8xf32>
    %97 = tpu.matmul %96, %94, %cst {dimension_numbers = #tpu.dot_dimension_numbers<[1], [0], [0], [1], [0, 0, 1, 1], [], []>} : vector<4x16xbf16>, vector<16x8xbf16>, vector<4x8xf32> -> vector<4x8xf32>
    %98 = vector.extract_strided_slice %93 {offsets = [0, 32], sizes = [4, 16], strides = [1, 1]} : vector<4x256xf32> to vector<4x16xf32>
    %99 = arith.truncf %98 : vector<4x16xf32> to vector<4x16xbf16>
    %cst_33 = arith.constant dense<0.000000e+00> : vector<4x8xf32>
    %100 = tpu.matmul %99, %94, %cst_33 {dimension_numbers = #tpu.dot_dimension_numbers<[1], [0], [0], [1], [0, 0, 1, 1], [], []>} : vector<4x16xbf16>, vector<16x8xbf16>, vector<4x8xf32> -> vector<4x8xf32>
    %101 = vector.extract_strided_slice %93 {offsets = [0, 64], sizes = [4, 16], strides = [1, 1]} : vector<4x256xf32> to vector<4x16xf32>
    %102 = arith.truncf %101 : vector<4x16xf32> to vector<4x16xbf16>
    %cst_34 = arith.constant dense<0.000000e+00> : vector<4x8xf32>
    %103 = tpu.matmul %102, %94, %cst_34 {dimension_numbers = #tpu.dot_dimension_numbers<[1], [0], [0], [1], [0, 0, 1, 1], [], []>} : vector<4x16xbf16>, vector<16x8xbf16>, vector<4x8xf32> -> vector<4x8xf32>
    %104 = vector.extract_strided_slice %93 {offsets = [0, 96], sizes = [4, 16], strides = [1, 1]} : vector<4x256xf32> to vector<4x16xf32>
    %105 = arith.truncf %104 : vector<4x16xf32> to vector<4x16xbf16>
    %cst_35 = arith.constant dense<0.000000e+00> : vector<4x8xf32>
    %106 = tpu.matmul %105, %94, %cst_35 {dimension_numbers = #tpu.dot_dimension_numbers<[1], [0], [0], [1], [0, 0, 1, 1], [], []>} : vector<4x16xbf16>, vector<16x8xbf16>, vector<4x8xf32> -> vector<4x8xf32>
    %107 = vector.extract_strided_slice %93 {offsets = [0, 128], sizes = [4, 16], strides = [1, 1]} : vector<4x256xf32> to vector<4x16xf32>
    %108 = arith.truncf %107 : vector<4x16xf32> to vector<4x16xbf16>
    %cst_36 = arith.constant dense<0.000000e+00> : vector<4x8xf32>
    %109 = tpu.matmul %108, %94, %cst_36 {dimension_numbers = #tpu.dot_dimension_numbers<[1], [0], [0], [1], [0, 0, 1, 1], [], []>} : vector<4x16xbf16>, vector<16x8xbf16>, vector<4x8xf32> -> vector<4x8xf32>
    %110 = vector.extract_strided_slice %93 {offsets = [0, 160], sizes = [4, 16], strides = [1, 1]} : vector<4x256xf32> to vector<4x16xf32>
    %111 = arith.truncf %110 : vector<4x16xf32> to vector<4x16xbf16>
    %cst_37 = arith.constant dense<0.000000e+00> : vector<4x8xf32>
    %112 = tpu.matmul %111, %94, %cst_37 {dimension_numbers = #tpu.dot_dimension_numbers<[1], [0], [0], [1], [0, 0, 1, 1], [], []>} : vector<4x16xbf16>, vector<16x8xbf16>, vector<4x8xf32> -> vector<4x8xf32>
    %113 = vector.extract_strided_slice %93 {offsets = [0, 192], sizes = [4, 16], strides = [1, 1]} : vector<4x256xf32> to vector<4x16xf32>
    %114 = arith.truncf %113 : vector<4x16xf32> to vector<4x16xbf16>
    %cst_38 = arith.constant dense<0.000000e+00> : vector<4x8xf32>
    %115 = tpu.matmul %114, %94, %cst_38 {dimension_numbers = #tpu.dot_dimension_numbers<[1], [0], [0], [1], [0, 0, 1, 1], [], []>} : vector<4x16xbf16>, vector<16x8xbf16>, vector<4x8xf32> -> vector<4x8xf32>
    %116 = vector.extract_strided_slice %93 {offsets = [0, 224], sizes = [4, 16], strides = [1, 1]} : vector<4x256xf32> to vector<4x16xf32>
    %117 = arith.truncf %116 : vector<4x16xf32> to vector<4x16xbf16>
    %cst_39 = arith.constant dense<0.000000e+00> : vector<4x8xf32>
    %118 = tpu.matmul %117, %94, %cst_39 {dimension_numbers = #tpu.dot_dimension_numbers<[1], [0], [0], [1], [0, 0, 1, 1], [], []>} : vector<4x16xbf16>, vector<16x8xbf16>, vector<4x8xf32> -> vector<4x8xf32>
    %119 = tpu.concatenate %97, %100, %103, %106, %109, %112, %115, %118 in 1 : vector<4x8xf32>, vector<4x8xf32>, vector<4x8xf32>, vector<4x8xf32>, vector<4x8xf32>, vector<4x8xf32>, vector<4x8xf32>, vector<4x8xf32> -> vector<4x64xf32>
    %c0_40 = arith.constant 0 : index
    %c0_41 = arith.constant 0 : index
    %120 = vector.load %arg10[%c0_40, %c0_41] : memref<8x4xbf16, #tpu.memory_space<vmem>>, vector<8x4xbf16>
    %121 = arith.truncf %119 : vector<4x64xf32> to vector<4x64xbf16>
    %cst_42 = arith.constant dense<0.000000e+00> : vector<8x64xf32>
    %122 = tpu.matmul %120, %121, %cst_42 {dimension_numbers = #tpu.dot_dimension_numbers<[1], [0], [0], [1], [0, 0, 1, 1], [], []>} : vector<8x4xbf16>, vector<4x64xbf16>, vector<8x64xf32> -> vector<8x64xf32>
    %c0_43 = arith.constant 0 : index
    %c0_44 = arith.constant 0 : index
    %123 = vector.load %arg6[%c0_43, %c0_44] : memref<4x1xf32, #tpu.memory_space<vmem>>, vector<4x1xf32>
    %c0_45 = arith.constant 0 : index
    %c0_46 = arith.constant 0 : index
    %124 = vector.load %arg7[%c0_45, %c0_46] : memref<4x1xf32, #tpu.memory_space<vmem>>, vector<4x1xf32>
    %cst_47 = arith.constant dense<0.000000e+00> : vector<4xf32>
    %125 = vector.multi_reduction <add>, %91, %cst_47 [1] : vector<4x256xf32> to vector<4xf32>
    %126 = vector.shape_cast %125 : vector<4xf32> to vector<4x1xf32>
    %cst_48 = arith.constant 3.906250e-03 : f32
    %127 = vector.broadcast %cst_48 : f32 to vector<4x1xf32>
    %128 = arith.mulf %126, %127 : vector<4x1xf32>
    %129 = vector.broadcast %128 : vector<4x1xf32> to vector<4x256xf32>
    %130 = arith.subf %91, %129 : vector<4x256xf32>
    %131 = arith.mulf %130, %130 : vector<4x256xf32>
    %cst_49 = arith.constant dense<0.000000e+00> : vector<4xf32>
    %132 = vector.multi_reduction <add>, %131, %cst_49 [1] : vector<4x256xf32> to vector<4xf32>
    %133 = vector.shape_cast %132 : vector<4xf32> to vector<4x1xf32>
    %cst_50 = arith.constant 3.906250e-03 : f32
    %134 = vector.broadcast %cst_50 : f32 to vector<4x1xf32>
    %135 = arith.mulf %133, %134 : vector<4x1xf32>
    %cst_51 = arith.constant 9.99999974E-6 : f32
    %136 = vector.broadcast %cst_51 : f32 to vector<4x1xf32>
    %137 = arith.addf %135, %136 : vector<4x1xf32>
    %138 = math.rsqrt %137 : vector<4x1xf32>
    %139 = arith.mulf %123, %138 : vector<4x1xf32>
    %140 = vector.broadcast %139 : vector<4x1xf32> to vector<4x256xf32>
    %141 = arith.mulf %130, %140 : vector<4x256xf32>
    %142 = vector.broadcast %124 : vector<4x1xf32> to vector<4x256xf32>
    %143 = arith.addf %141, %142 : vector<4x256xf32>
    %cst_52 = arith.constant 2.000000e-01 : f32
    %144 = vector.broadcast %cst_52 : f32 to vector<4x256xf32>
    %145 = arith.mulf %144, %143 : vector<4x256xf32>
    %146 = arith.maximumf %143, %145 : vector<4x256xf32>
    %c17_i32 = arith.constant 17 : i32
    %147 = tpu.dynamic_rotate %146 by %c17_i32 dim 1 : vector<4x256xf32>, i32 -> vector<4x256xf32>
    %cst_53 = arith.constant 0.000000e+00 : f32
    %148 = vector.shape_cast %21 : vector<1x256xi1> to vector<1x256xi1>
    %149 = vector.broadcast %148 : vector<1x256xi1> to vector<4x256xi1>
    %150 = vector.broadcast %cst_53 : f32 to vector<4x256xf32>
    %151 = arith.select %149, %147, %150 : vector<4x256xi1>, vector<4x256xf32>
    %152 = arith.truncf %151 : vector<4x256xf32> to vector<4x256xbf16>
    %c16_i32_54 = arith.constant 16 : i32
    %153 = tpu.dynamic_rotate %146 by %c16_i32_54 dim 1 : vector<4x256xf32>, i32 -> vector<4x256xf32>
    %cst_55 = arith.constant 0.000000e+00 : f32
    %154 = vector.shape_cast %23 : vector<1x256xi1> to vector<1x256xi1>
    %155 = vector.broadcast %154 : vector<1x256xi1> to vector<4x256xi1>
    %156 = vector.broadcast %cst_55 : f32 to vector<4x256xf32>
    %157 = arith.select %155, %153, %156 : vector<4x256xi1>, vector<4x256xf32>
    %158 = arith.truncf %157 : vector<4x256xf32> to vector<4x256xbf16>
    %c15_i32_56 = arith.constant 15 : i32
    %159 = tpu.dynamic_rotate %146 by %c15_i32_56 dim 1 : vector<4x256xf32>, i32 -> vector<4x256xf32>
    %cst_57 = arith.constant 0.000000e+00 : f32
    %160 = vector.shape_cast %28 : vector<1x256xi1> to vector<1x256xi1>
    %161 = vector.broadcast %160 : vector<1x256xi1> to vector<4x256xi1>
    %162 = vector.broadcast %cst_57 : f32 to vector<4x256xf32>
    %163 = arith.select %161, %159, %162 : vector<4x256xi1>, vector<4x256xf32>
    %164 = arith.truncf %163 : vector<4x256xf32> to vector<4x256xbf16>
    %c1_i32_58 = arith.constant 1 : i32
    %165 = tpu.dynamic_rotate %146 by %c1_i32_58 dim 1 : vector<4x256xf32>, i32 -> vector<4x256xf32>
    %cst_59 = arith.constant 0.000000e+00 : f32
    %166 = vector.shape_cast %30 : vector<1x256xi1> to vector<1x256xi1>
    %167 = vector.broadcast %166 : vector<1x256xi1> to vector<4x256xi1>
    %168 = vector.broadcast %cst_59 : f32 to vector<4x256xf32>
    %169 = arith.select %167, %165, %168 : vector<4x256xi1>, vector<4x256xf32>
    %170 = arith.truncf %169 : vector<4x256xf32> to vector<4x256xbf16>
    %171 = arith.truncf %146 : vector<4x256xf32> to vector<4x256xbf16>
    %c255_i32 = arith.constant 255 : i32
    %172 = tpu.dynamic_rotate %146 by %c255_i32 dim 1 : vector<4x256xf32>, i32 -> vector<4x256xf32>
    %cst_60 = arith.constant 0.000000e+00 : f32
    %173 = vector.shape_cast %32 : vector<1x256xi1> to vector<1x256xi1>
    %174 = vector.broadcast %173 : vector<1x256xi1> to vector<4x256xi1>
    %175 = vector.broadcast %cst_60 : f32 to vector<4x256xf32>
    %176 = arith.select %174, %172, %175 : vector<4x256xi1>, vector<4x256xf32>
    %177 = arith.truncf %176 : vector<4x256xf32> to vector<4x256xbf16>
    %c241_i32 = arith.constant 241 : i32
    %178 = tpu.dynamic_rotate %146 by %c241_i32 dim 1 : vector<4x256xf32>, i32 -> vector<4x256xf32>
    %cst_61 = arith.constant 0.000000e+00 : f32
    %179 = vector.shape_cast %37 : vector<1x256xi1> to vector<1x256xi1>
    %180 = vector.broadcast %179 : vector<1x256xi1> to vector<4x256xi1>
    %181 = vector.broadcast %cst_61 : f32 to vector<4x256xf32>
    %182 = arith.select %180, %178, %181 : vector<4x256xi1>, vector<4x256xf32>
    %183 = arith.truncf %182 : vector<4x256xf32> to vector<4x256xbf16>
    %c240_i32_62 = arith.constant 240 : i32
    %184 = tpu.dynamic_rotate %146 by %c240_i32_62 dim 1 : vector<4x256xf32>, i32 -> vector<4x256xf32>
    %cst_63 = arith.constant 0.000000e+00 : f32
    %185 = vector.shape_cast %39 : vector<1x256xi1> to vector<1x256xi1>
    %186 = vector.broadcast %185 : vector<1x256xi1> to vector<4x256xi1>
    %187 = vector.broadcast %cst_63 : f32 to vector<4x256xf32>
    %188 = arith.select %186, %184, %187 : vector<4x256xi1>, vector<4x256xf32>
    %189 = arith.truncf %188 : vector<4x256xf32> to vector<4x256xbf16>
    %c239_i32 = arith.constant 239 : i32
    %190 = tpu.dynamic_rotate %146 by %c239_i32 dim 1 : vector<4x256xf32>, i32 -> vector<4x256xf32>
    %cst_64 = arith.constant 0.000000e+00 : f32
    %191 = vector.shape_cast %44 : vector<1x256xi1> to vector<1x256xi1>
    %192 = vector.broadcast %191 : vector<1x256xi1> to vector<4x256xi1>
    %193 = vector.broadcast %cst_64 : f32 to vector<4x256xf32>
    %194 = arith.select %192, %190, %193 : vector<4x256xi1>, vector<4x256xf32>
    %195 = arith.truncf %194 : vector<4x256xf32> to vector<4x256xbf16>
    %196 = tpu.concatenate %152, %158, %164, %170, %171, %177, %183, %189, %195 in 0 : vector<4x256xbf16>, vector<4x256xbf16>, vector<4x256xbf16>, vector<4x256xbf16>, vector<4x256xbf16>, vector<4x256xbf16>, vector<4x256xbf16>, vector<4x256xbf16>, vector<4x256xbf16> -> vector<36x256xbf16>
    %c0_65 = arith.constant 0 : index
    %c0_66 = arith.constant 0 : index
    %197 = vector.load %arg2[%c0_65, %c0_66] : memref<4x36xbf16, #tpu.memory_space<vmem>>, vector<4x36xbf16>
    %cst_67 = arith.constant dense<0.000000e+00> : vector<4x256xf32>
    %198 = tpu.matmul %197, %196, %cst_67 {dimension_numbers = #tpu.dot_dimension_numbers<[1], [0], [0], [1], [0, 0, 1, 1], [], []>} : vector<4x36xbf16>, vector<36x256xbf16>, vector<4x256xf32> -> vector<4x256xf32>
    %c0_68 = arith.constant 0 : index
    %c0_69 = arith.constant 0 : index
    %199 = vector.load %arg3[%c0_68, %c0_69] : memref<4x1xf32, #tpu.memory_space<vmem>>, vector<4x1xf32>
    %200 = vector.broadcast %199 : vector<4x1xf32> to vector<4x256xf32>
    %201 = arith.addf %198, %200 : vector<4x256xf32>
    %c240_i32_70 = arith.constant 240 : i32
    %202 = tpu.dynamic_rotate %201 by %c240_i32_70 dim 1 : vector<4x256xf32>, i32 -> vector<4x256xf32>
    %203 = arith.addf %201, %202 : vector<4x256xf32>
    %c0_71 = arith.constant 0 : index
    %c0_72 = arith.constant 0 : index
    %204 = vector.load %arg11[%c0_71, %c0_72] : memref<16x8xbf16, #tpu.memory_space<vmem>>, vector<16x8xbf16>
    %205 = vector.extract_strided_slice %203 {offsets = [0, 0], sizes = [4, 16], strides = [1, 1]} : vector<4x256xf32> to vector<4x16xf32>
    %206 = arith.truncf %205 : vector<4x16xf32> to vector<4x16xbf16>
    %cst_73 = arith.constant dense<0.000000e+00> : vector<4x8xf32>
    %207 = tpu.matmul %206, %204, %cst_73 {dimension_numbers = #tpu.dot_dimension_numbers<[1], [0], [0], [1], [0, 0, 1, 1], [], []>} : vector<4x16xbf16>, vector<16x8xbf16>, vector<4x8xf32> -> vector<4x8xf32>
    %208 = vector.extract_strided_slice %203 {offsets = [0, 32], sizes = [4, 16], strides = [1, 1]} : vector<4x256xf32> to vector<4x16xf32>
    %209 = arith.truncf %208 : vector<4x16xf32> to vector<4x16xbf16>
    %cst_74 = arith.constant dense<0.000000e+00> : vector<4x8xf32>
    %210 = tpu.matmul %209, %204, %cst_74 {dimension_numbers = #tpu.dot_dimension_numbers<[1], [0], [0], [1], [0, 0, 1, 1], [], []>} : vector<4x16xbf16>, vector<16x8xbf16>, vector<4x8xf32> -> vector<4x8xf32>
    %211 = vector.extract_strided_slice %203 {offsets = [0, 64], sizes = [4, 16], strides = [1, 1]} : vector<4x256xf32> to vector<4x16xf32>
    %212 = arith.truncf %211 : vector<4x16xf32> to vector<4x16xbf16>
    %cst_75 = arith.constant dense<0.000000e+00> : vector<4x8xf32>
    %213 = tpu.matmul %212, %204, %cst_75 {dimension_numbers = #tpu.dot_dimension_numbers<[1], [0], [0], [1], [0, 0, 1, 1], [], []>} : vector<4x16xbf16>, vector<16x8xbf16>, vector<4x8xf32> -> vector<4x8xf32>
    %214 = vector.extract_strided_slice %203 {offsets = [0, 96], sizes = [4, 16], strides = [1, 1]} : vector<4x256xf32> to vector<4x16xf32>
    %215 = arith.truncf %214 : vector<4x16xf32> to vector<4x16xbf16>
    %cst_76 = arith.constant dense<0.000000e+00> : vector<4x8xf32>
    %216 = tpu.matmul %215, %204, %cst_76 {dimension_numbers = #tpu.dot_dimension_numbers<[1], [0], [0], [1], [0, 0, 1, 1], [], []>} : vector<4x16xbf16>, vector<16x8xbf16>, vector<4x8xf32> -> vector<4x8xf32>
    %217 = vector.extract_strided_slice %203 {offsets = [0, 128], sizes = [4, 16], strides = [1, 1]} : vector<4x256xf32> to vector<4x16xf32>
    %218 = arith.truncf %217 : vector<4x16xf32> to vector<4x16xbf16>
    %cst_77 = arith.constant dense<0.000000e+00> : vector<4x8xf32>
    %219 = tpu.matmul %218, %204, %cst_77 {dimension_numbers = #tpu.dot_dimension_numbers<[1], [0], [0], [1], [0, 0, 1, 1], [], []>} : vector<4x16xbf16>, vector<16x8xbf16>, vector<4x8xf32> -> vector<4x8xf32>
    %220 = vector.extract_strided_slice %203 {offsets = [0, 160], sizes = [4, 16], strides = [1, 1]} : vector<4x256xf32> to vector<4x16xf32>
    %221 = arith.truncf %220 : vector<4x16xf32> to vector<4x16xbf16>
    %cst_78 = arith.constant dense<0.000000e+00> : vector<4x8xf32>
    %222 = tpu.matmul %221, %204, %cst_78 {dimension_numbers = #tpu.dot_dimension_numbers<[1], [0], [0], [1], [0, 0, 1, 1], [], []>} : vector<4x16xbf16>, vector<16x8xbf16>, vector<4x8xf32> -> vector<4x8xf32>
    %223 = vector.extract_strided_slice %203 {offsets = [0, 192], sizes = [4, 16], strides = [1, 1]} : vector<4x256xf32> to vector<4x16xf32>
    %224 = arith.truncf %223 : vector<4x16xf32> to vector<4x16xbf16>
    %cst_79 = arith.constant dense<0.000000e+00> : vector<4x8xf32>
    %225 = tpu.matmul %224, %204, %cst_79 {dimension_numbers = #tpu.dot_dimension_numbers<[1], [0], [0], [1], [0, 0, 1, 1], [], []>} : vector<4x16xbf16>, vector<16x8xbf16>, vector<4x8xf32> -> vector<4x8xf32>
    %226 = vector.extract_strided_slice %203 {offsets = [0, 224], sizes = [4, 16], strides = [1, 1]} : vector<4x256xf32> to vector<4x16xf32>
    %227 = arith.truncf %226 : vector<4x16xf32> to vector<4x16xbf16>
    %cst_80 = arith.constant dense<0.000000e+00> : vector<4x8xf32>
    %228 = tpu.matmul %227, %204, %cst_80 {dimension_numbers = #tpu.dot_dimension_numbers<[1], [0], [0], [1], [0, 0, 1, 1], [], []>} : vector<4x16xbf16>, vector<16x8xbf16>, vector<4x8xf32> -> vector<4x8xf32>
    %229 = tpu.concatenate %207, %210, %213, %216, %219, %222, %225, %228 in 1 : vector<4x8xf32>, vector<4x8xf32>, vector<4x8xf32>, vector<4x8xf32>, vector<4x8xf32>, vector<4x8xf32>, vector<4x8xf32>, vector<4x8xf32> -> vector<4x64xf32>
    %c0_81 = arith.constant 0 : index
    %c0_82 = arith.constant 0 : index
    %230 = vector.load %arg8[%c0_81, %c0_82] : memref<4x1xf32, #tpu.memory_space<vmem>>, vector<4x1xf32>
    %c0_83 = arith.constant 0 : index
    %c0_84 = arith.constant 0 : index
    %231 = vector.load %arg9[%c0_83, %c0_84] : memref<4x1xf32, #tpu.memory_space<vmem>>, vector<4x1xf32>
    %cst_85 = arith.constant dense<0.000000e+00> : vector<4xf32>
    %232 = vector.multi_reduction <add>, %229, %cst_85 [1] : vector<4x64xf32> to vector<4xf32>
    %233 = vector.shape_cast %232 : vector<4xf32> to vector<4x1xf32>
    %cst_86 = arith.constant 1.562500e-02 : f32
    %234 = vector.broadcast %cst_86 : f32 to vector<4x1xf32>
    %235 = arith.mulf %233, %234 : vector<4x1xf32>
    %236 = vector.broadcast %235 : vector<4x1xf32> to vector<4x64xf32>
    %237 = arith.subf %229, %236 : vector<4x64xf32>
    %238 = arith.mulf %237, %237 : vector<4x64xf32>
    %cst_87 = arith.constant dense<0.000000e+00> : vector<4xf32>
    %239 = vector.multi_reduction <add>, %238, %cst_87 [1] : vector<4x64xf32> to vector<4xf32>
    %240 = vector.shape_cast %239 : vector<4xf32> to vector<4x1xf32>
    %cst_88 = arith.constant 1.562500e-02 : f32
    %241 = vector.broadcast %cst_88 : f32 to vector<4x1xf32>
    %242 = arith.mulf %240, %241 : vector<4x1xf32>
    %cst_89 = arith.constant 9.99999974E-6 : f32
    %243 = vector.broadcast %cst_89 : f32 to vector<4x1xf32>
    %244 = arith.addf %242, %243 : vector<4x1xf32>
    %245 = math.rsqrt %244 : vector<4x1xf32>
    %246 = arith.mulf %230, %245 : vector<4x1xf32>
    %247 = vector.broadcast %246 : vector<4x1xf32> to vector<4x64xf32>
    %248 = arith.mulf %237, %247 : vector<4x64xf32>
    %249 = vector.broadcast %231 : vector<4x1xf32> to vector<4x64xf32>
    %250 = arith.addf %248, %249 : vector<4x64xf32>
    %cst_90 = arith.constant 2.000000e-01 : f32
    %251 = vector.broadcast %cst_90 : f32 to vector<4x64xf32>
    %252 = arith.mulf %251, %250 : vector<4x64xf32>
    %253 = arith.maximumf %250, %252 : vector<4x64xf32>
    %c9_i32 = arith.constant 9 : i32
    %254 = tpu.dynamic_rotate %253 by %c9_i32 dim 1 : vector<4x64xf32>, i32 -> vector<4x64xf32>
    %cst_91 = arith.constant 0.000000e+00 : f32
    %255 = vector.shape_cast %66 : vector<1x64xi1> to vector<1x64xi1>
    %256 = vector.broadcast %255 : vector<1x64xi1> to vector<4x64xi1>
    %257 = vector.broadcast %cst_91 : f32 to vector<4x64xf32>
    %258 = arith.select %256, %254, %257 : vector<4x64xi1>, vector<4x64xf32>
    %259 = arith.truncf %258 : vector<4x64xf32> to vector<4x64xbf16>
    %c8_i32_92 = arith.constant 8 : i32
    %260 = tpu.dynamic_rotate %253 by %c8_i32_92 dim 1 : vector<4x64xf32>, i32 -> vector<4x64xf32>
    %cst_93 = arith.constant 0.000000e+00 : f32
    %261 = vector.shape_cast %68 : vector<1x64xi1> to vector<1x64xi1>
    %262 = vector.broadcast %261 : vector<1x64xi1> to vector<4x64xi1>
    %263 = vector.broadcast %cst_93 : f32 to vector<4x64xf32>
    %264 = arith.select %262, %260, %263 : vector<4x64xi1>, vector<4x64xf32>
    %265 = arith.truncf %264 : vector<4x64xf32> to vector<4x64xbf16>
    %c7_i32_94 = arith.constant 7 : i32
    %266 = tpu.dynamic_rotate %253 by %c7_i32_94 dim 1 : vector<4x64xf32>, i32 -> vector<4x64xf32>
    %cst_95 = arith.constant 0.000000e+00 : f32
    %267 = vector.shape_cast %73 : vector<1x64xi1> to vector<1x64xi1>
    %268 = vector.broadcast %267 : vector<1x64xi1> to vector<4x64xi1>
    %269 = vector.broadcast %cst_95 : f32 to vector<4x64xf32>
    %270 = arith.select %268, %266, %269 : vector<4x64xi1>, vector<4x64xf32>
    %271 = arith.truncf %270 : vector<4x64xf32> to vector<4x64xbf16>
    %c1_i32_96 = arith.constant 1 : i32
    %272 = tpu.dynamic_rotate %253 by %c1_i32_96 dim 1 : vector<4x64xf32>, i32 -> vector<4x64xf32>
    %cst_97 = arith.constant 0.000000e+00 : f32
    %273 = vector.shape_cast %75 : vector<1x64xi1> to vector<1x64xi1>
    %274 = vector.broadcast %273 : vector<1x64xi1> to vector<4x64xi1>
    %275 = vector.broadcast %cst_97 : f32 to vector<4x64xf32>
    %276 = arith.select %274, %272, %275 : vector<4x64xi1>, vector<4x64xf32>
    %277 = arith.truncf %276 : vector<4x64xf32> to vector<4x64xbf16>
    %278 = arith.truncf %253 : vector<4x64xf32> to vector<4x64xbf16>
    %c63_i32 = arith.constant 63 : i32
    %279 = tpu.dynamic_rotate %253 by %c63_i32 dim 1 : vector<4x64xf32>, i32 -> vector<4x64xf32>
    %cst_98 = arith.constant 0.000000e+00 : f32
    %280 = vector.shape_cast %77 : vector<1x64xi1> to vector<1x64xi1>
    %281 = vector.broadcast %280 : vector<1x64xi1> to vector<4x64xi1>
    %282 = vector.broadcast %cst_98 : f32 to vector<4x64xf32>
    %283 = arith.select %281, %279, %282 : vector<4x64xi1>, vector<4x64xf32>
    %284 = arith.truncf %283 : vector<4x64xf32> to vector<4x64xbf16>
    %c57_i32 = arith.constant 57 : i32
    %285 = tpu.dynamic_rotate %253 by %c57_i32 dim 1 : vector<4x64xf32>, i32 -> vector<4x64xf32>
    %cst_99 = arith.constant 0.000000e+00 : f32
    %286 = vector.shape_cast %82 : vector<1x64xi1> to vector<1x64xi1>
    %287 = vector.broadcast %286 : vector<1x64xi1> to vector<4x64xi1>
    %288 = vector.broadcast %cst_99 : f32 to vector<4x64xf32>
    %289 = arith.select %287, %285, %288 : vector<4x64xi1>, vector<4x64xf32>
    %290 = arith.truncf %289 : vector<4x64xf32> to vector<4x64xbf16>
    %c56_i32_100 = arith.constant 56 : i32
    %291 = tpu.dynamic_rotate %253 by %c56_i32_100 dim 1 : vector<4x64xf32>, i32 -> vector<4x64xf32>
    %cst_101 = arith.constant 0.000000e+00 : f32
    %292 = vector.shape_cast %84 : vector<1x64xi1> to vector<1x64xi1>
    %293 = vector.broadcast %292 : vector<1x64xi1> to vector<4x64xi1>
    %294 = vector.broadcast %cst_101 : f32 to vector<4x64xf32>
    %295 = arith.select %293, %291, %294 : vector<4x64xi1>, vector<4x64xf32>
    %296 = arith.truncf %295 : vector<4x64xf32> to vector<4x64xbf16>
    %c55_i32 = arith.constant 55 : i32
    %297 = tpu.dynamic_rotate %253 by %c55_i32 dim 1 : vector<4x64xf32>, i32 -> vector<4x64xf32>
    %cst_102 = arith.constant 0.000000e+00 : f32
    %298 = vector.shape_cast %89 : vector<1x64xi1> to vector<1x64xi1>
    %299 = vector.broadcast %298 : vector<1x64xi1> to vector<4x64xi1>
    %300 = vector.broadcast %cst_102 : f32 to vector<4x64xf32>
    %301 = arith.select %299, %297, %300 : vector<4x64xi1>, vector<4x64xf32>
    %302 = arith.truncf %301 : vector<4x64xf32> to vector<4x64xbf16>
    %303 = tpu.concatenate %259, %265, %271, %277, %278, %284, %290, %296, %302 in 0 : vector<4x64xbf16>, vector<4x64xbf16>, vector<4x64xbf16>, vector<4x64xbf16>, vector<4x64xbf16>, vector<4x64xbf16>, vector<4x64xbf16>, vector<4x64xbf16>, vector<4x64xbf16> -> vector<36x64xbf16>
    %c0_103 = arith.constant 0 : index
    %c0_104 = arith.constant 0 : index
    %304 = vector.load %arg4[%c0_103, %c0_104] : memref<8x36xbf16, #tpu.memory_space<vmem>>, vector<8x36xbf16>
    %cst_105 = arith.constant dense<0.000000e+00> : vector<8x64xf32>
    %305 = tpu.matmul %304, %303, %cst_105 {dimension_numbers = #tpu.dot_dimension_numbers<[1], [0], [0], [1], [0, 0, 1, 1], [], []>} : vector<8x36xbf16>, vector<36x64xbf16>, vector<8x64xf32> -> vector<8x64xf32>
    %c0_106 = arith.constant 0 : index
    %c0_107 = arith.constant 0 : index
    %306 = vector.load %arg5[%c0_106, %c0_107] : memref<8x1xf32, #tpu.memory_space<vmem>>, vector<8x1xf32>
    %307 = vector.broadcast %306 : vector<8x1xf32> to vector<8x64xf32>
    %308 = arith.addf %305, %307 : vector<8x64xf32>
    %309 = arith.addf %122, %308 : vector<8x64xf32>
    %cst_108 = arith.constant 0.707106769 : f32
    %310 = vector.broadcast %cst_108 : f32 to vector<8x64xf32>
    %311 = arith.mulf %309, %310 : vector<8x64xf32>
    %c0_109 = arith.constant 0 : index
    %c0_110 = arith.constant 0 : index
    %c0_111 = arith.constant 0 : index
    %312 = vector.load %arg12[%c0_109, %c0_110, %c0_111] : memref<1x8x64xf32, #tpu.memory_space<vmem>>, vector<1x8x64xf32>
    %313 = vector.shape_cast %312 : vector<1x8x64xf32> to vector<8x64xf32>
    %314 = vector.shape_cast %311 : vector<8x64xf32> to vector<1x8x64xf32>
    tpu.vector_store %arg12[%c0_109, %c0_110, %c0_111], %314 {strides = array<i32>} : memref<1x8x64xf32, #tpu.memory_space<vmem>>, vector<1x8x64xf32>,
    return
  }
  func.func @transform_0(%arg0: i32) -> (i32, i32, i32) {
    %c0_i32 = arith.constant 0 : i32
    %c0_i32_0 = arith.constant 0 : i32
    %c0_i32_1 = arith.constant 0 : i32
    return %arg0, %c0_i32, %c0_i32_0 : i32, i32, i32
  }
  func.func @transform_1(%arg0: i32) -> (i32, i32) {
    %c0_i32 = arith.constant 0 : i32
    %c0_i32_0 = arith.constant 0 : i32
    %c0_i32_1 = arith.constant 0 : i32
    return %c0_i32, %c0_i32_0 : i32, i32
  }
  func.func @transform_2(%arg0: i32) -> (i32, i32) {
    %c0_i32 = arith.constant 0 : i32
    %c0_i32_0 = arith.constant 0 : i32
    %c0_i32_1 = arith.constant 0 : i32
    return %c0_i32, %c0_i32_0 : i32, i32
  }
  func.func @transform_3(%arg0: i32) -> (i32, i32) {
    %c0_i32 = arith.constant 0 : i32
    %c0_i32_0 = arith.constant 0 : i32
    %c0_i32_1 = arith.constant 0 : i32
    return %c0_i32, %c0_i32_0 : i32, i32
  }
  func.func @transform_4(%arg0: i32) -> (i32, i32) {
    %c0_i32 = arith.constant 0 : i32
    %c0_i32_0 = arith.constant 0 : i32
    %c0_i32_1 = arith.constant 0 : i32
    return %c0_i32, %c0_i32_0 : i32, i32
  }
  func.func @transform_5(%arg0: i32) -> (i32, i32) {
    %c0_i32 = arith.constant 0 : i32
    %c0_i32_0 = arith.constant 0 : i32
    %c0_i32_1 = arith.constant 0 : i32
    return %c0_i32, %c0_i32_0 : i32, i32
  }
  func.func @transform_6(%arg0: i32) -> (i32, i32) {
    %c0_i32 = arith.constant 0 : i32
    %c0_i32_0 = arith.constant 0 : i32
    %c0_i32_1 = arith.constant 0 : i32
    return %c0_i32, %c0_i32_0 : i32, i32
  }
  func.func @transform_7(%arg0: i32) -> (i32, i32) {
    %c0_i32 = arith.constant 0 : i32
    %c0_i32_0 = arith.constant 0 : i32
    %c0_i32_1 = arith.constant 0 : i32
    return %c0_i32, %c0_i32_0 : i32, i32
  }
  func.func @transform_8(%arg0: i32) -> (i32, i32) {
    %c0_i32 = arith.constant 0 : i32
    %c0_i32_0 = arith.constant 0 : i32
    %c0_i32_1 = arith.constant 0 : i32
    return %c0_i32, %c0_i32_0 : i32, i32
  }
  func.func @transform_9(%arg0: i32) -> (i32, i32) {
    %c0_i32 = arith.constant 0 : i32
    %c0_i32_0 = arith.constant 0 : i32
    %c0_i32_1 = arith.constant 0 : i32
    return %c0_i32, %c0_i32_0 : i32, i32
  }
  func.func @transform_10(%arg0: i32) -> (i32, i32) {
    %c0_i32 = arith.constant 0 : i32
    %c0_i32_0 = arith.constant 0 : i32
    %c0_i32_1 = arith.constant 0 : i32
    return %c0_i32, %c0_i32_0 : i32, i32
  }
  func.func @transform_11(%arg0: i32) -> (i32, i32, i32) {
    %c0_i32 = arith.constant 0 : i32
    %c0_i32_0 = arith.constant 0 : i32
    %c0_i32_1 = arith.constant 0 : i32
    return %arg0, %c0_i32, %c0_i32_0 : i32, i32, i32
  }
}

</mosaic_0001>

<llo_original>
// kernel: tpu_custom_call.1
$region0: #{tpu_custom_call.1}
  #allocation0 [shape = 'u32[]', space=smem, size = 0x4, offset = 0x4, fixed_abs, tag = 'smem constant byte address 0x4 - core index']
  #allocation1 [shape = 'u32[144,128]{1,0:T(1,128)}', space=vmem, size = 0x12000, scoped, tag = 'internal scratch']
  %s0 = inlined_call_operand.vmem [shape: f32[2,4,256], index: 0, kind: input, shape index: {}]
  %s1 = inlined_call_operand.vmem [shape: bf16[4,36], index: 1, kind: input, shape index: {}]
  %s2 = inlined_call_operand.vmem [shape: f32[4,1], index: 2, kind: input, shape index: {}]
  %s3 = inlined_call_operand.vmem [shape: bf16[8,36], index: 3, kind: input, shape index: {}]
  %s4 = inlined_call_operand.vmem [shape: f32[8,1], index: 4, kind: input, shape index: {}]
  %s5 = inlined_call_operand.vmem [shape: f32[4,1], index: 5, kind: input, shape index: {}]
  %s6 = inlined_call_operand.vmem [shape: f32[4,1], index: 6, kind: input, shape index: {}]
  %s7 = inlined_call_operand.vmem [shape: f32[4,1], index: 7, kind: input, shape index: {}]
  %s8 = inlined_call_operand.vmem [shape: f32[4,1], index: 8, kind: input, shape index: {}]
  %s9 = inlined_call_operand.vmem [shape: bf16[8,4], index: 9, kind: input, shape index: {}]
  %s10 = inlined_call_operand.vmem [shape: bf16[16,8], index: 10, kind: input, shape index: {}]
  %s11 = inlined_call_operand.hbm [shape: f32[2,8,64], index: 11, kind: output, shape index: {}]
  %s12 = sld [smem:[#allocation0]]
  $region77: #{tpu_custom_call.1} parent=0
    _
  %s14 = ssub.s32 1, %s12
  %s15 = scalar_select 0, %s14, %s12
  $region1: #{tpu_custom_call.1} parent=0
    #allocation2 [shape = 'u8[8192]{0}', space=vmem, size = 0x2000, scoped, tag = 'output window, operand 0']
    #allocation3 [shape = 's32[2]{0}', space=sflag, size = 0x8, scoped, tag = 'scoped memory for tpu_custom_call.1']
    %16 = vsyncpa [#allocation3], 0
    %s17 = scalar_lea.sflag [#allocation3], 1
    %18 = vsyncpa %s17, 0
    loop: start=0, step=1, limit=4
    $region2: #{tpu_custom_call.1} parent=1 // loop_pre_header
      _
    $region3: #{tpu_custom_call.1} parent=1 // loop_header
      %s20 = sphi 0, %s24
      %p21 = scmp.ge.s32.totalorder %s20, 4
      %s30 = sphi 0, %s32
      %s33 = sphi 0, %s30
      %s34 = sphi 0, %s33
      %s50 = sphi 0, %s34
      %s54 = sphi 0, %s54
      %s56 = sphi 0, %s54
      %s57 = sphi 0, %s56
      %s71 = sphi 0, %s57
      %s75 = sphi 0, %s75
      %s77 = sphi 0, %s75
      %s78 = sphi 0, %s77
      %s92 = sphi 0, %s78
      %s96 = sphi 0, %s96
      %s98 = sphi 0, %s96
      %s99 = sphi 0, %s98
      %s113 = sphi 0, %s99
      %s117 = sphi 0, %s117
      %s119 = sphi 0, %s117
      %s120 = sphi 0, %s119
      %s134 = sphi 0, %s120
      %s138 = sphi 0, %s138
      %s140 = sphi 0, %s138
      %s141 = sphi 0, %s140
      %s155 = sphi 0, %s141
      %s159 = sphi 0, %s159
      %s161 = sphi 0, %s159
      %s162 = sphi 0, %s161
      %s176 = sphi 0, %s162
      %s180 = sphi 0, %s180
      %s182 = sphi 0, %s180
      %s183 = sphi 0, %s182
      %s197 = sphi 0, %s183
      %s201 = sphi 0, %s201
      %s203 = sphi 0, %s201
      %s204 = sphi 0, %s203
      %s218 = sphi 0, %s204
      %s222 = sphi 0, %s222
      %s224 = sphi 0, %s222
      %s225 = sphi 0, %s224
      %s239 = sphi 0, %s225
      %s243 = sphi 0, %s243
      %s245 = sphi 0, %s243
      %s246 = sphi 0, %s245
      %s260 = sphi 0, %s246
      %s266 = sphi 0, %s268
      %s269 = sphi 0, %s266
      %s270 = sphi 0, %s269
      %s286 = sphi 0, %s270
    $region4: #{tpu_custom_call.1} parent=1 // loop_header_branch
      %23 = sbr.rel (%p21) target = $region8
    $region5: #{tpu_custom_call.1} parent=1 // loop_body
      %s25 = ssub.s32 %s20, 1
      %s26 = ssub.s32 %s20, 2
      %s27 = sadd.s32 %s20, 1
      %s28 = ssub.s32 %s20, %s27
      %p29 = scmp.eq.s32.totalorder %s28, 0
      %s31 = sadd.s32 %s30, 1
      %s32 = scalar_select %p29, %s30, %s31
      %p35 = pneg %p29
      %p36 = scmp.eq.s32.totalorder %s20, 1
      %p37 = por %p35, %p36
      %p38 = scmp.ne.s32.totalorder %s30, %s33
      %p39 = scmp.eq.s32.totalorder %s20, 0
      %p40 = por %p38, %p39
      %p41 = scmp.ne.s32.totalorder %s30, %s33
      %p42 = scmp.eq.s32.totalorder %s25, 1
      %p43 = por %p41, %p42
      %p44 = scmp.ne.s32.totalorder %s33, %s34
      %p45 = scmp.eq.s32.totalorder %s25, 0
      %p46 = por %p44, %p45
      %p47 = scmp.ne.s32.totalorder %s33, %s34
      %p48 = scmp.eq.s32.totalorder %s26, 1
      %p49 = por %p47, %p48
      %p51 = scmp.ne.s32.totalorder %s34, %s50
      %p52 = scmp.eq.s32.totalorder %s26, 0
      %p53 = por %p51, %p52
      %s55 = sadd.s32 %s54, 1
      %p58 = scmp.eq.s32.totalorder %s20, 1
      %p59 = scmp.ne.s32.totalorder %s54, %s56
      %p60 = scmp.eq.s32.totalorder %s20, 0
      %p61 = por %p59, %p60
      %p62 = scmp.ne.s32.totalorder %s54, %s56
      %p63 = scmp.eq.s32.totalorder %s25, 1
      %p64 = por %p62, %p63
      %p65 = scmp.ne.s32.totalorder %s56, %s57
      %p66 = scmp.eq.s32.totalorder %s25, 0
      %p67 = por %p65, %p66
      %p68 = scmp.ne.s32.totalorder %s56, %s57
      %p69 = scmp.eq.s32.totalorder %s26, 1
      %p70 = por %p68, %p69
      %p72 = scmp.ne.s32.totalorder %s57, %s71
      %p73 = scmp.eq.s32.totalorder %s26, 0
      %p74 = por %p72, %p73
      %s76 = sadd.s32 %s75, 1
      %p79 = scmp.eq.s32.totalorder %s20, 1
      %p80 = scmp.ne.s32.totalorder %s75, %s77
      %p81 = scmp.eq.s32.totalorder %s20, 0
      %p82 = por %p80, %p81
      %p83 = scmp.ne.s32.totalorder %s75, %s77
      %p84 = scmp.eq.s32.totalorder %s25, 1
      %p85 = por %p83, %p84
      %p86 = scmp.ne.s32.totalorder %s77, %s78
      %p87 = scmp.eq.s32.totalorder %s25, 0
      %p88 = por %p86, %p87
      %p89 = scmp.ne.s32.totalorder %s77, %s78
      %p90 = scmp.eq.s32.totalorder %s26, 1
      %p91 = por %p89, %p90
      %p93 = scmp.ne.s32.totalorder %s78, %s92
      %p94 = scmp.eq.s32.totalorder %s26, 0
      %p95 = por %p93, %p94
      %s97 = sadd.s32 %s96, 1
      %p100 = scmp.eq.s32.totalorder %s20, 1
      %p101 = scmp.ne.s32.totalorder %s96, %s98
      %p102 = scmp.eq.s32.totalorder %s20, 0
      %p103 = por %p101, %p102
      %p104 = scmp.ne.s32.totalorder %s96, %s98
      %p105 = scmp.eq.s32.totalorder %s25, 1
      %p106 = por %p104, %p105
      %p107 = scmp.ne.s32.totalorder %s98, %s99
      %p108 = scmp.eq.s32.totalorder %s25, 0
      %p109 = por %p107, %p108
      %p110 = scmp.ne.s32.totalorder %s98, %s99
      %p111 = scmp.eq.s32.totalorder %s26, 1
      %p112 = por %p110, %p111
      %p114 = scmp.ne.s32.totalorder %s99, %s113
      %p115 = scmp.eq.s32.totalorder %s26, 0
      %p116 = por %p114, %p115
      %s118 = sadd.s32 %s117, 1
      %p121 = scmp.eq.s32.totalorder %s20, 1
      %p122 = scmp.ne.s32.totalorder %s117, %s119
      %p123 = scmp.eq.s32.totalorder %s20, 0
      %p124 = por %p122, %p123
      %p125 = scmp.ne.s32.totalorder %s117, %s119
      %p126 = scmp.eq.s32.totalorder %s25, 1
      %p127 = por %p125, %p126
      %p128 = scmp.ne.s32.totalorder %s119, %s120
      %p129 = scmp.eq.s32.totalorder %s25, 0
      %p130 = por %p128, %p129
      %p131 = scmp.ne.s32.totalorder %s119, %s120
      %p132 = scmp.eq.s32.totalorder %s26, 1
      %p133 = por %p131, %p132
      %p135 = scmp.ne.s32.totalorder %s120, %s134
      %p136 = scmp.eq.s32.totalorder %s26, 0
      %p137 = por %p135, %p136
      %s139 = sadd.s32 %s138, 1
      %p142 = scmp.eq.s32.totalorder %s20, 1
      %p143 = scmp.ne.s32.totalorder %s138, %s140
      %p144 = scmp.eq.s32.totalorder %s20, 0
      %p145 = por %p143, %p144
      %p146 = scmp.ne.s32.totalorder %s138, %s140
      %p147 = scmp.eq.s32.totalorder %s25, 1
      %p148 = por %p146, %p147
      %p149 = scmp.ne.s32.totalorder %s140, %s141
      %p150 = scmp.eq.s32.totalorder %s25, 0
      %p151 = por %p149, %p150
      %p152 = scmp.ne.s32.totalorder %s140, %s141
      %p153 = scmp.eq.s32.totalorder %s26, 1
      %p154 = por %p152, %p153
      %p156 = scmp.ne.s32.totalorder %s141, %s155
      %p157 = scmp.eq.s32.totalorder %s26, 0
      %p158 = por %p156, %p157
      %s160 = sadd.s32 %s159, 1
      %p163 = scmp.eq.s32.totalorder %s20, 1
      %p164 = scmp.ne.s32.totalorder %s159, %s161
      %p165 = scmp.eq.s32.totalorder %s20, 0
      %p166 = por %p164, %p165
      %p167 = scmp.ne.s32.totalorder %s159, %s161
      %p168 = scmp.eq.s32.totalorder %s25, 1
      %p169 = por %p167, %p168
      %p170 = scmp.ne.s32.totalorder %s161, %s162
      %p171 = scmp.eq.s32.totalorder %s25, 0
      %p172 = por %p170, %p171
      %p173 = scmp.ne.s32.totalorder %s161, %s162
      %p174 = scmp.eq.s32.totalorder %s26, 1
      %p175 = por %p173, %p174
      %p177 = scmp.ne.s32.totalorder %s162, %s176
      %p178 = scmp.eq.s32.totalorder %s26, 0
      %p179 = por %p177, %p178
      %s181 = sadd.s32 %s180, 1
      %p184 = scmp.eq.s32.totalorder %s20, 1
      %p185 = scmp.ne.s32.totalorder %s180, %s182
      %p186 = scmp.eq.s32.totalorder %s20, 0
      %p187 = por %p185, %p186
      %p188 = scmp.ne.s32.totalorder %s180, %s182
      %p189 = scmp.eq.s32.totalorder %s25, 1
      %p190 = por %p188, %p189
      %p191 = scmp.ne.s32.totalorder %s182, %s183
      %p192 = scmp.eq.s32.totalorder %s25, 0
      %p193 = por %p191, %p192
      %p194 = scmp.ne.s32.totalorder %s182, %s183
      %p195 = scmp.eq.s32.totalorder %s26, 1
      %p196 = por %p194, %p195
      %p198 = scmp.ne.s32.totalorder %s183, %s197
      %p199 = scmp.eq.s32.totalorder %s26, 0
      %p200 = por %p198, %p199
      %s202 = sadd.s32 %s201, 1
      %p205 = scmp.eq.s32.totalorder %s20, 1
      %p206 = scmp.ne.s32.totalorder %s201, %s203
      %p207 = scmp.eq.s32.totalorder %s20, 0
      %p208 = por %p206, %p207
      %p209 = scmp.ne.s32.totalorder %s201, %s203
      %p210 = scmp.eq.s32.totalorder %s25, 1
      %p211 = por %p209, %p210
      %p212 = scmp.ne.s32.totalorder %s203, %s204
      %p213 = scmp.eq.s32.totalorder %s25, 0
      %p214 = por %p212, %p213
      %p215 = scmp.ne.s32.totalorder %s203, %s204
      %p216 = scmp.eq.s32.totalorder %s26, 1
      %p217 = por %p215, %p216
      %p219 = scmp.ne.s32.totalorder %s204, %s218
      %p220 = scmp.eq.s32.totalorder %s26, 0
      %p221 = por %p219, %p220
      %s223 = sadd.s32 %s222, 1
      %p226 = scmp.eq.s32.totalorder %s20, 1
      %p227 = scmp.ne.s32.totalorder %s222, %s224
      %p228 = scmp.eq.s32.totalorder %s20, 0
      %p229 = por %p227, %p228
      %p230 = scmp.ne.s32.totalorder %s222, %s224
      %p231 = scmp.eq.s32.totalorder %s25, 1
      %p232 = por %p230, %p231
      %p233 = scmp.ne.s32.totalorder %s224, %s225
      %p234 = scmp.eq.s32.totalorder %s25, 0
      %p235 = por %p233, %p234
      %p236 = scmp.ne.s32.totalorder %s224, %s225
      %p237 = scmp.eq.s32.totalorder %s26, 1
      %p238 = por %p236, %p237
      %p240 = scmp.ne.s32.totalorder %s225, %s239
      %p241 = scmp.eq.s32.totalorder %s26, 0
      %p242 = por %p240, %p241
      %s244 = sadd.s32 %s243, 1
      %p247 = scmp.eq.s32.totalorder %s20, 1
      %p248 = scmp.ne.s32.totalorder %s243, %s245
      %p249 = scmp.eq.s32.totalorder %s20, 0
      %p250 = por %p248, %p249
      %p251 = scmp.ne.s32.totalorder %s243, %s245
      %p252 = scmp.eq.s32.totalorder %s25, 1
      %p253 = por %p251, %p252
      %p254 = scmp.ne.s32.totalorder %s245, %s246
      %p255 = scmp.eq.s32.totalorder %s25, 0
      %p256 = por %p254, %p255
      %p257 = scmp.ne.s32.totalorder %s245, %s246
      %p258 = scmp.eq.s32.totalorder %s26, 1
      %p259 = por %p257, %p258
      %p261 = scmp.ne.s32.totalorder %s246, %s260
      %p262 = scmp.eq.s32.totalorder %s26, 0
      %p263 = por %p261, %p262
      %s264 = ssub.s32 %s20, %s27
      %p265 = scmp.eq.s32.totalorder %s264, 0
      %s267 = sadd.s32 %s266, 1
      %s268 = scalar_select %p265, %s266, %s267
      %p271 = pneg %p265
      %p272 = scmp.eq.s32.totalorder %s20, 1
      %p273 = por %p271, %p272
      %p274 = scmp.ne.s32.totalorder %s266, %s269
      %p275 = scmp.eq.s32.totalorder %s20, 0
      %p276 = por %p274, %p275
      %p277 = scmp.ne.s32.totalorder %s266, %s269
      %p278 = scmp.eq.s32.totalorder %s25, 1
      %p279 = por %p277, %p278
      %p280 = scmp.ne.s32.totalorder %s269, %s270
      %p281 = scmp.eq.s32.totalorder %s25, 0
      %p282 = por %p280, %p281
      %p283 = scmp.ne.s32.totalorder %s269, %s270
      %p284 = scmp.eq.s32.totalorder %s26, 1
      %p285 = por %p283, %p284
      %p287 = scmp.ne.s32.totalorder %s270, %s286
      %p288 = scmp.eq.s32.totalorder %s26, 0
      %p289 = por %p287, %p288
      %p290 = scmp.le.s32.totalorder 1, %s20
      %p291 = scmp.lt.s32.totalorder %s20, 3
      %p292 = pnand %p290, %p291
      %p293 = pneg %p292
      // Predicated region
      $region9: #{tpu_custom_call.1} parent=5 // pred_check
        _
      $region10: #{tpu_custom_call.1} parent=5 // pred_check_branch
        %295 = sbr.rel (%p292) target = $region12
      $region11: #{tpu_custom_call.1} parent=5 // pred_region
        %s296 = ssub.s32 %s20, 1
        // Predicated region
        $region13: #{tpu_custom_call.1} parent=11 // pred_check
          %p297 = pneg %p67
        $region14: #{tpu_custom_call.1} parent=11 // pred_check_branch
          %299 = sbr.rel (%p297) target = $region16
        $region15: #{tpu_custom_call.1} parent=11 // pred_region
          _
        $region16: #{tpu_custom_call.1} parent=11 // pred_fallthru
          _
        // Predicated region
        $region17: #{tpu_custom_call.1} parent=11 // pred_check
          %p300 = pneg %p88
        $region18: #{tpu_custom_call.1} parent=11 // pred_check_branch
          %302 = sbr.rel (%p300) target = $region20
        $region19: #{tpu_custom_call.1} parent=11 // pred_region
          _
        $region20: #{tpu_custom_call.1} parent=11 // pred_fallthru
          _
        // Predicated region
        $region21: #{tpu_custom_call.1} parent=11 // pred_check
          %p303 = pneg %p109
        $region22: #{tpu_custom_call.1} parent=11 // pred_check_branch
          %305 = sbr.rel (%p303) target = $region24
        $region23: #{tpu_custom_call.1} parent=11 // pred_region
          _
        $region24: #{tpu_custom_call.1} parent=11 // pred_fallthru
          _
        // Predicated region
        $region25: #{tpu_custom_call.1} parent=11 // pred_check
          %p306 = pneg %p130
        $region26: #{tpu_custom_call.1} parent=11 // pred_check_branch
          %308 = sbr.rel (%p306) target = $region28
        $region27: #{tpu_custom_call.1} parent=11 // pred_region
          _
        $region28: #{tpu_custom_call.1} parent=11 // pred_fallthru
          _
        // Predicated region
        $region29: #{tpu_custom_call.1} parent=11 // pred_check
          %p309 = pneg %p151
        $region30: #{tpu_custom_call.1} parent=11 // pred_check_branch
          %311 = sbr.rel (%p309) target = $region32
        $region31: #{tpu_custom_call.1} parent=11 // pred_region
          _
        $region32: #{tpu_custom_call.1} parent=11 // pred_fallthru
          _
        // Predicated region
        $region33: #{tpu_custom_call.1} parent=11 // pred_check
          %p312 = pneg %p172
        $region34: #{tpu_custom_call.1} parent=11 // pred_check_branch
          %314 = sbr.rel (%p312) target = $region36
        $region35: #{tpu_custom_call.1} parent=11 // pred_region
          _
        $region36: #{tpu_custom_call.1} parent=11 // pred_fallthru
          _
        // Predicated region
        $region37: #{tpu_custom_call.1} parent=11 // pred_check
          %p315 = pneg %p193
        $region38: #{tpu_custom_call.1} parent=11 // pred_check_branch
          %317 = sbr.rel (%p315) target = $region40
        $region39: #{tpu_custom_call.1} parent=11 // pred_region
          _
        $region40: #{tpu_custom_call.1} parent=11 // pred_fallthru
          _
        // Predicated region
        $region41: #{tpu_custom_call.1} parent=11 // pred_check
          %p318 = pneg %p214
        $region42: #{tpu_custom_call.1} parent=11 // pred_check_branch
          %320 = sbr.rel (%p318) target = $region44
        $region43: #{tpu_custom_call.1} parent=11 // pred_region
          _
        $region44: #{tpu_custom_call.1} parent=11 // pred_fallthru
          _
        // Predicated region
        $region45: #{tpu_custom_call.1} parent=11 // pred_check
          %p321 = pneg %p235
        $region46: #{tpu_custom_call.1} parent=11 // pred_check_branch
          %323 = sbr.rel (%p321) target = $region48
        $region47: #{tpu_custom_call.1} parent=11 // pred_region
          _
        $region48: #{tpu_custom_call.1} parent=11 // pred_fallthru
          _
        // Predicated region
        $region49: #{tpu_custom_call.1} parent=11 // pred_check
          %p324 = pneg %p256
        $region50: #{tpu_custom_call.1} parent=11 // pred_check_branch
          %326 = sbr.rel (%p324) target = $region52
        $region51: #{tpu_custom_call.1} parent=11 // pred_region
          _
        $region52: #{tpu_custom_call.1} parent=11 // pred_fallthru
          _
      $region12: #{tpu_custom_call.1} parent=5 // pred_fallthru
        _
      %p327 = scmp.lt.s32.totalorder %s20, 2
      // Predicated region
      $region53: #{tpu_custom_call.1} parent=5 // pred_check
        %p328 = pneg %p327
      $region54: #{tpu_custom_call.1} parent=5 // pred_check_branch
        %330 = sbr.rel (%p328) target = $region56
      $region55: #{tpu_custom_call.1} parent=5 // pred_region
        // Predicated region
        $region57: #{tpu_custom_call.1} parent=55 // pred_check
          %p331 = pneg %p40
        $region58: #{tpu_custom_call.1} parent=55 // pred_check_branch
          %333 = sbr.rel (%p331) target = $region60
        $region59: #{tpu_custom_call.1} parent=55 // pred_region
          %p334 = scmp.lt.s32.totalorder %s20, 1
          %s335 = scalar_select %p334, %s20, 1
          %s336 = smul.addr %s335, 2
          %s337 = smul.addr %s336, 4
          %s338 = scalar_lea.vmem %s0, %s337
        $region60: #{tpu_custom_call.1} parent=55 // pred_fallthru
          _
      $region56: #{tpu_custom_call.1} parent=5 // pred_fallthru
        _
      %p339 = scmp.le.s32.totalorder 1, %s20
      %p340 = scmp.lt.s32.totalorder %s20, 3
      %p341 = pnand %p339, %p340
      %p342 = pneg %p341
      // Predicated region
      $region61: #{tpu_custom_call.1} parent=5 // pred_check
        _
      $region62: #{tpu_custom_call.1} parent=5 // pred_check_branch
        %344 = sbr.rel (%p341) target = $region64
      $region63: #{tpu_custom_call.1} parent=5 // pred_region
        %s345 = ssub.s32 %s20, 1
        %p346 = scmp.lt.s32.totalorder %s25, 1
        %s347 = scalar_select %p346, %s25, 1
        %s348 = smul.addr %s347, 2
        %s349 = smul.addr %s348, 4
        %s350 = scalar_lea.vmem %s0, %s349
        %p351 = pneg %p46
        %p352 = pneg %p43
        %p353 = pneg %p67
        %p354 = pneg %p64
        %p355 = pneg %p88
        %p356 = pneg %p85
        %p357 = pneg %p109
        %p358 = pneg %p106
        %p359 = pneg %p130
        %p360 = pneg %p127
        %p361 = pneg %p151
        %p362 = pneg %p148
        %p363 = pneg %p172
        %p364 = pneg %p169
        %p365 = pneg %p193
        %p366 = pneg %p190
        %p367 = pneg %p214
        %p368 = pneg %p211
        %p369 = pneg %p235
        %p370 = pneg %p232
        %p371 = pneg %p256
        %p372 = pneg %p253
        %p373 = pneg %p282
        %p374 = pneg %p279
        %s375 = sand.u32 %s269, 1
        %s376 = scalar_lea.sflag [#allocation3], %s375
        %s377 = sand.u32 %s269, 1
        %s378 = smul.addr %s377, 8
        %s379 = scalar_lea.vmem [#allocation2], %s378
        %p380 = scmp.lt.s32.totalorder %s25, 1
        %s381 = scalar_select %p380, %s25, 1
        %s382 = smul.addr %s381, 2
        %s383 = smul.addr %s382, 4
        %s384 = scalar_lea.vmem %s0, %s383
        %v386 = vlaneseq
        %v387 = vand.u32 %v386, 127
        %v388 = vadd.s32 %v387, 128
        %vm389 = vcmp.lt.s32.totalorder %v387, 0
        %v390 = vsub.s32 0, %v387
        %v391 = vsel %vm389, %v390, %v387
        %v392 = vshrl.u32 %v391, 4
        %v393 = vand.u32 %v391, 15
        %v394 = vsub.s32 0, %v393
        %v395 = vsel %vm389, %v394, %v393
        %vm396 = vcmp.lt.s32.totalorder %v388, 0
        %v397 = vsub.s32 0, %v388
        %v398 = vsel %vm396, %v397, %v388
        %v399 = vshrl.u32 %v398, 4
        %v400 = vand.u32 %v398, 15
        %v401 = vsub.s32 0, %v400
        %v402 = vsel %vm396, %v401, %v400
        %vm403 = vcmp.ne.s32.totalorder %v395, 0
        %vm404 = vcmp.ne.s32.totalorder %v402, 0
        %vm405 = vcmp.lt.s32.totalorder %v395, 0
        %vm406 = vcmp.lt.s32.totalorder %v402, 0
        %vm407 = vmand %vm405, %vm403
        %vm408 = vmand %vm406, %vm404
        %v409 = vadd.s32 %v395, 16
        %v410 = vadd.s32 %v402, 16
        %v411 = vsel %vm407, %v409, %v395
        %v412 = vsel %vm408, %v410, %v402
        %vm413 = vcmp.gt.s32.totalorder %v411, 0
        %vm414 = vcmp.gt.s32.totalorder %v412, 0
        %vm415 = vcmp.ge.s32.totalorder %v387, 16
        %vm416 = vcmp.ge.s32.totalorder %v388, 16
        %vm417 = vmand %vm413, %vm415
        %vm418 = vmand %vm414, %vm416
        %vm419 = vcmp.lt.s32.totalorder %v411, 15
        %vm420 = vcmp.lt.s32.totalorder %v412, 15
        %vm421 = vmand %vm419, %vm415
        %vm422 = vmand %vm420, %vm416
        %vm423 = vcmp.lt.s32.totalorder %v387, 240
        %vm424 = vcmp.lt.s32.totalorder %v388, 240
        %vm425 = vmand %vm413, %vm423
        %vm426 = vmand %vm414, %vm424
        %vm427 = vmand %vm419, %vm423
        %vm428 = vmand %vm420, %vm424
        %vm429 = vcmp.lt.s32.totalorder %v387, 0
        %v430 = vsub.s32 0, %v387
        %v431 = vsel %vm429, %v430, %v387
        %v432 = vshrl.u32 %v431, 3
        %v433 = vand.u32 %v431, 7
        %v434 = vsub.s32 0, %v433
        %v435 = vsel %vm429, %v434, %v433
        %vm436 = vcmp.ne.s32.totalorder %v435, 0
        %vm437 = vcmp.lt.s32.totalorder %v435, 0
        %vm438 = vmand %vm437, %vm436
        %v439 = vadd.s32 %v435, 8
        %v440 = vsel %vm438, %v439, %v435
        %vm441 = vcmp.gt.s32.totalorder %v440, 0
        %vm442 = vcmp.ge.s32.totalorder %v387, 8
        %vm443 = vmand %vm441, %vm442
        %vm444 = vcmp.lt.s32.totalorder %v440, 7
        %vm445 = vmand %vm444, %vm442
        %vm446 = vcmp.lt.s32.totalorder %v387, 56
        %vm447 = vmand %vm441, %vm446
        %vm448 = vmand %vm444, %vm446
        %v449 = vld [vmem:[%s384] sm:$0xff]
        %v451 = vcombine.high %v449, %v449
        %453 = vrot.lane.b32.xlu0 %v449, 112
        %v454 = vpop.permute.xlu0 %453
        %455 = vrot.lane.b32.xlu0 %v451, 112
        %v456 = vpop.permute.xlu0 %455
        %vm457 = vcmp.lt.s32.totalorder %v387, 112
        %v458 = vsel %vm457, %v454, %v456
        %v459 = vsel %vm457, %v456, %v454
        %v462 = vcombine.low %v458, %v459
        %v464 = vadd.f32 %v449, %v462
        %v465 = vld [vmem:[%s10] sm:$0xf]
        %v466 = vld [vmem:[%s10 + $0x4] sm:$0xf]
        %v467 = vpack.c.bf16 %v464, %v464
        %v470 = vunpack.c.l.b16 %v465
        %v471 = vunpack.c.l.b16 %v466
        %v472 = vpack.c.b16 %v471, %v470
        %vm474 = vcmask 130048
        %v476 = vsel %vm474, %v467, 0
        %478 = vmatprep.subr.bf16.mxu0 0
        %479 = vmatpush1.bf16.msra.mxu0 %v472
        %480 = vmatprep.subr.bf16.mxu0 0
        %481 = vmatpush1.bf16.msra.mxu0 0
        %482 = vmatprep.subr.bf16.mxu0 0
        %483 = vmatpush1.bf16.msra.mxu0 0
        %484 = vmatprep.subr.bf16.mxu0 0
        %485 = vmatpush1.bf16.msra.mxu0 0
        %486 = vmatprep.subr.bf16.mxu0 0
        %487 = vmatpush1.bf16.msra.mxu0 0
        %488 = vmatprep.subr.bf16.mxu0 0
        %489 = vmatpush1.bf16.msra.mxu0 0
        %490 = vmatprep.subr.bf16.mxu0 0
        %491 = vmatpush1.bf16.msra.mxu0 0
        %492 = vmatprep.subr.bf16.mxu0 0
        %493 = vmatpush1.bf16.msra.mxu0 0
        %494 = vmatprep.subr.bf16.mxu0 0
        %495 = vmatpush1.bf16.msra.mxu0 0
        %496 = vmatprep.subr.bf16.mxu0 0
        %497 = vmatpush1.bf16.msra.mxu0 0
        %498 = vmatprep.subr.bf16.mxu0 0
        %499 = vmatpush1.bf16.msra.mxu0 0
        %500 = vmatprep.subr.bf16.mxu0 0
        %501 = vmatpush1.bf16.msra.mxu0 0
        %502 = vmatprep.subr.bf16.mxu0 0
        %503 = vmatpush1.bf16.msra.mxu0 0
        %504 = vmatprep.subr.bf16.mxu0 0
        %505 = vmatpush1.bf16.msra.mxu0 0
        %506 = vmatprep.subr.bf16.mxu0 0
        %507 = vmatpush1.bf16.msra.mxu0 0
        %508 = vmatprep.subr.bf16.mxu0 0
        %509 = vmatpush1.bf16.msra.mxu0 0
        %510 = vmatprep.mubr.bf16.mxu0 0
        %511 = vmatmul.mubr.bf16.gmra.mrb[0].mxu0 %v476
        %v512 = vpop.f32.mrb[0].mxu0
        %v513 = vadd.f32 0.0, %v512
        %v514 = vpop.f32.mrb[0].mxu0
        %v515 = vpop.f32.mrb[0].mxu0
        %v516 = vpop.f32.mrb[0].mxu0
        %517 = vdwg.mxu0
        %519 = vrot.lane.b32.xlu0 %v467, 96
        %v520 = vpop.permute.xlu0 %519
        %v522 = vsel %vm474, %v520, 0
        %524 = vmatprep.subr.bf16.mxu0 0
        %525 = vmatpush1.bf16.msra.mxu0 %v472
        %526 = vmatprep.subr.bf16.mxu0 0
        %527 = vmatpush1.bf16.msra.mxu0 0
        %528 = vmatprep.subr.bf16.mxu0 0
        %529 = vmatpush1.bf16.msra.mxu0 0
        %530 = vmatprep.subr.bf16.mxu0 0
        %531 = vmatpush1.bf16.msra.mxu0 0
        %532 = vmatprep.subr.bf16.mxu0 0
        %533 = vmatpush1.bf16.msra.mxu0 0
        %534 = vmatprep.subr.bf16.mxu0 0
        %535 = vmatpush1.bf16.msra.mxu0 0
        %536 = vmatprep.subr.bf16.mxu0 0
        %537 = vmatpush1.bf16.msra.mxu0 0
        %538 = vmatprep.subr.bf16.mxu0 0
        %539 = vmatpush1.bf16.msra.mxu0 0
        %540 = vmatprep.subr.bf16.mxu0 0
        %541 = vmatpush1.bf16.msra.mxu0 0
        %542 = vmatprep.subr.bf16.mxu0 0
        %543 = vmatpush1.bf16.msra.mxu0 0
        %544 = vmatprep.subr.bf16.mxu0 0
        %545 = vmatpush1.bf16.msra.mxu0 0
        %546 = vmatprep.subr.bf16.mxu0 0
        %547 = vmatpush1.bf16.msra.mxu0 0
        %548 = vmatprep.subr.bf16.mxu0 0
        %549 = vmatpush1.bf16.msra.mxu0 0
        %550 = vmatprep.subr.bf16.mxu0 0
        %551 = vmatpush1.bf16.msra.mxu0 0
        %552 = vmatprep.subr.bf16.mxu0 0
        %553 = vmatpush1.bf16.msra.mxu0 0
        %554 = vmatprep.subr.bf16.mxu0 0
        %555 = vmatpush1.bf16.msra.mxu0 0
        %556 = vmatprep.mubr.bf16.mxu0 0
        %557 = vmatmul.mubr.bf16.gmra.mrb[0].mxu0 %v522
        %v558 = vpop.f32.mrb[0].mxu0
        %v559 = vadd.f32 0.0, %v558
        %v560 = vpop.f32.mrb[0].mxu0
        %v561 = vpop.f32.mrb[0].mxu0
        %v562 = vpop.f32.mrb[0].mxu0
        %563 = vdwg.mxu0
        %564 = vrot.lane.b32.xlu0 %v467, 64
        %v565 = vpop.permute.xlu0 %564
        %v567 = vsel %vm474, %v565, 0
        %569 = vmatprep.subr.bf16.mxu0 0
        %570 = vmatpush1.bf16.msra.mxu0 %v472
        %571 = vmatprep.subr.bf16.mxu0 0
        %572 = vmatpush1.bf16.msra.mxu0 0
        %573 = vmatprep.subr.bf16.mxu0 0
        %574 = vmatpush1.bf16.msra.mxu0 0
        %575 = vmatprep.subr.bf16.mxu0 0
        %576 = vmatpush1.bf16.msra.mxu0 0
        %577 = vmatprep.subr.bf16.mxu0 0
        %578 = vmatpush1.bf16.msra.mxu0 0
        %579 = vmatprep.subr.bf16.mxu0 0
        %580 = vmatpush1.bf16.msra.mxu0 0
        %581 = vmatprep.subr.bf16.mxu0 0
        %582 = vmatpush1.bf16.msra.mxu0 0
        %583 = vmatprep.subr.bf16.mxu0 0
        %584 = vmatpush1.bf16.msra.mxu0 0
        %585 = vmatprep.subr.bf16.mxu0 0
        %586 = vmatpush1.bf16.msra.mxu0 0
        %587 = vmatprep.subr.bf16.mxu0 0
        %588 = vmatpush1.bf16.msra.mxu0 0
        %589 = vmatprep.subr.bf16.mxu0 0
        %590 = vmatpush1.bf16.msra.mxu0 0
        %591 = vmatprep.subr.bf16.mxu0 0
        %592 = vmatpush1.bf16.msra.mxu0 0
        %593 = vmatprep.subr.bf16.mxu0 0
        %594 = vmatpush1.bf16.msra.mxu0 0
        %595 = vmatprep.subr.bf16.mxu0 0
        %596 = vmatpush1.bf16.msra.mxu0 0
        %597 = vmatprep.subr.bf16.mxu0 0
        %598 = vmatpush1.bf16.msra.mxu0 0
        %599 = vmatprep.subr.bf16.mxu0 0
        %600 = vmatpush1.bf16.msra.mxu0 0
        %601 = vmatprep.mubr.bf16.mxu0 0
        %602 = vmatmul.mubr.bf16.gmra.mrb[0].mxu0 %v567
        %v603 = vpop.f32.mrb[0].mxu0
        %v604 = vadd.f32 0.0, %v603
        %v605 = vpop.f32.mrb[0].mxu0
        %v606 = vpop.f32.mrb[0].mxu0
        %v607 = vpop.f32.mrb[0].mxu0
        %608 = vdwg.mxu0
        %609 = vrot.lane.b32.xlu0 %v467, 32
        %v610 = vpop.permute.xlu0 %609
        %v612 = vsel %vm474, %v610, 0
        %614 = vmatprep.subr.bf16.mxu0 0
        %615 = vmatpush1.bf16.msra.mxu0 %v472
        %616 = vmatprep.subr.bf16.mxu0 0
        %617 = vmatpush1.bf16.msra.mxu0 0
        %618 = vmatprep.subr.bf16.mxu0 0
        %619 = vmatpush1.bf16.msra.mxu0 0
        %620 = vmatprep.subr.bf16.mxu0 0
        %621 = vmatpush1.bf16.msra.mxu0 0
        %622 = vmatprep.subr.bf16.mxu0 0
        %623 = vmatpush1.bf16.msra.mxu0 0
        %624 = vmatprep.subr.bf16.mxu0 0
        %625 = vmatpush1.bf16.msra.mxu0 0
        %626 = vmatprep.subr.bf16.mxu0 0
        %627 = vmatpush1.bf16.msra.mxu0 0
        %628 = vmatprep.subr.bf16.mxu0 0
        %629 = vmatpush1.bf16.msra.mxu0 0
        %630 = vmatprep.subr.bf16.mxu0 0
        %631 = vmatpush1.bf16.msra.mxu0 0
        %632 = vmatprep.subr.bf16.mxu0 0
        %633 = vmatpush1.bf16.msra.mxu0 0
        %634 = vmatprep.subr.bf16.mxu0 0
        %635 = vmatpush1.bf16.msra.mxu0 0
        %636 = vmatprep.subr.bf16.mxu0 0
        %637 = vmatpush1.bf16.msra.mxu0 0
        %638 = vmatprep.subr.bf16.mxu0 0
        %639 = vmatpush1.bf16.msra.mxu0 0
        %640 = vmatprep.subr.bf16.mxu0 0
        %641 = vmatpush1.bf16.msra.mxu0 0
        %642 = vmatprep.subr.bf16.mxu0 0
        %643 = vmatpush1.bf16.msra.mxu0 0
        %644 = vmatprep.subr.bf16.mxu0 0
        %645 = vmatpush1.bf16.msra.mxu0 0
        %646 = vmatprep.mubr.bf16.mxu0 0
        %647 = vmatmul.mubr.bf16.gmra.mrb[0].mxu0 %v612
        %v648 = vpop.f32.mrb[0].mxu0
        %v649 = vadd.f32 0.0, %v648
        %v650 = vpop.f32.mrb[0].mxu0
        %v651 = vpop.f32.mrb[0].mxu0
        %v652 = vpop.f32.mrb[0].mxu0
        %653 = vdwg.mxu0
        %v655 = vcombine.high %v464, %v464
        %v657 = vpack.c.bf16 %v655, %v655
        %v659 = vsel %vm474, %v657, 0
        %661 = vmatprep.subr.bf16.mxu0 0
        %662 = vmatpush1.bf16.msra.mxu0 %v472
        %663 = vmatprep.subr.bf16.mxu0 0
        %664 = vmatpush1.bf16.msra.mxu0 0
        %665 = vmatprep.subr.bf16.mxu0 0
        %666 = vmatpush1.bf16.msra.mxu0 0
        %667 = vmatprep.subr.bf16.mxu0 0
        %668 = vmatpush1.bf16.msra.mxu0 0
        %669 = vmatprep.subr.bf16.mxu0 0
        %670 = vmatpush1.bf16.msra.mxu0 0
        %671 = vmatprep.subr.bf16.mxu0 0
        %672 = vmatpush1.bf16.msra.mxu0 0
        %673 = vmatprep.subr.bf16.mxu0 0
        %674 = vmatpush1.bf16.msra.mxu0 0
        %675 = vmatprep.subr.bf16.mxu0 0
        %676 = vmatpush1.bf16.msra.mxu0 0
        %677 = vmatprep.subr.bf16.mxu0 0
        %678 = vmatpush1.bf16.msra.mxu0 0
        %679 = vmatprep.subr.bf16.mxu0 0
        %680 = vmatpush1.bf16.msra.mxu0 0
        %681 = vmatprep.subr.bf16.mxu0 0
        %682 = vmatpush1.bf16.msra.mxu0 0
        %683 = vmatprep.subr.bf16.mxu0 0
        %684 = vmatpush1.bf16.msra.mxu0 0
        %685 = vmatprep.subr.bf16.mxu0 0
        %686 = vmatpush1.bf16.msra.mxu0 0
        %687 = vmatprep.subr.bf16.mxu0 0
        %688 = vmatpush1.bf16.msra.mxu0 0
        %689 = vmatprep.subr.bf16.mxu0 0
        %690 = vmatpush1.bf16.msra.mxu0 0
        %691 = vmatprep.subr.bf16.mxu0 0
        %692 = vmatpush1.bf16.msra.mxu0 0
        %693 = vmatprep.mubr.bf16.mxu0 0
        %694 = vmatmul.mubr.bf16.gmra.mrb[0].mxu0 %v659
        %v695 = vpop.f32.mrb[0].mxu0
        %v696 = vadd.f32 0.0, %v695
        %v697 = vpop.f32.mrb[0].mxu0
        %v698 = vpop.f32.mrb[0].mxu0
        %v699 = vpop.f32.mrb[0].mxu0
        %700 = vdwg.mxu0
        %701 = vrot.lane.b32.xlu0 %v655, 96
        %v702 = vpop.permute.xlu0 %701
        %v704 = vpack.c.bf16 %v702, %v702
        %v706 = vsel %vm474, %v704, 0
        %708 = vmatprep.subr.bf16.mxu0 0
        %709 = vmatpush1.bf16.msra.mxu0 %v472
        %710 = vmatprep.subr.bf16.mxu0 0
        %711 = vmatpush1.bf16.msra.mxu0 0
        %712 = vmatprep.subr.bf16.mxu0 0
        %713 = vmatpush1.bf16.msra.mxu0 0
        %714 = vmatprep.subr.bf16.mxu0 0
        %715 = vmatpush1.bf16.msra.mxu0 0
        %716 = vmatprep.subr.bf16.mxu0 0
        %717 = vmatpush1.bf16.msra.mxu0 0
        %718 = vmatprep.subr.bf16.mxu0 0
        %719 = vmatpush1.bf16.msra.mxu0 0
        %720 = vmatprep.subr.bf16.mxu0 0
        %721 = vmatpush1.bf16.msra.mxu0 0
        %722 = vmatprep.subr.bf16.mxu0 0
        %723 = vmatpush1.bf16.msra.mxu0 0
        %724 = vmatprep.subr.bf16.mxu0 0
        %725 = vmatpush1.bf16.msra.mxu0 0
        %726 = vmatprep.subr.bf16.mxu0 0
        %727 = vmatpush1.bf16.msra.mxu0 0
        %728 = vmatprep.subr.bf16.mxu0 0
        %729 = vmatpush1.bf16.msra.mxu0 0
        %730 = vmatprep.subr.bf16.mxu0 0
        %731 = vmatpush1.bf16.msra.mxu0 0
        %732 = vmatprep.subr.bf16.mxu0 0
        %733 = vmatpush1.bf16.msra.mxu0 0
        %734 = vmatprep.subr.bf16.mxu0 0
        %735 = vmatpush1.bf16.msra.mxu0 0
        %736 = vmatprep.subr.bf16.mxu0 0
        %737 = vmatpush1.bf16.msra.mxu0 0
        %738 = vmatprep.subr.bf16.mxu0 0
        %739 = vmatpush1.bf16.msra.mxu0 0
        %740 = vmatprep.mubr.bf16.mxu0 0
        %741 = vmatmul.mubr.bf16.gmra.mrb[0].mxu0 %v706
        %v742 = vpop.f32.mrb[0].mxu0
        %v743 = vadd.f32 0.0, %v742
        %v744 = vpop.f32.mrb[0].mxu0
        %v745 = vpop.f32.mrb[0].mxu0
        %v746 = vpop.f32.mrb[0].mxu0
        %747 = vdwg.mxu0
        %748 = vrot.lane.b32.xlu0 %v655, 64
        %v749 = vpop.permute.xlu0 %748
        %v751 = vpack.c.bf16 %v749, %v749
        %v753 = vsel %vm474, %v751, 0
        %755 = vmatprep.subr.bf16.mxu0 0
        %756 = vmatpush1.bf16.msra.mxu0 %v472
        %757 = vmatprep.subr.bf16.mxu0 0
        %758 = vmatpush1.bf16.msra.mxu0 0
        %759 = vmatprep.subr.bf16.mxu0 0
        %760 = vmatpush1.bf16.msra.mxu0 0
        %761 = vmatprep.subr.bf16.mxu0 0
        %762 = vmatpush1.bf16.msra.mxu0 0
        %763 = vmatprep.subr.bf16.mxu0 0
        %764 = vmatpush1.bf16.msra.mxu0 0
        %765 = vmatprep.subr.bf16.mxu0 0
        %766 = vmatpush1.bf16.msra.mxu0 0
        %767 = vmatprep.subr.bf16.mxu0 0
        %768 = vmatpush1.bf16.msra.mxu0 0
        %769 = vmatprep.subr.bf16.mxu0 0
        %770 = vmatpush1.bf16.msra.mxu0 0
        %771 = vmatprep.subr.bf16.mxu0 0
        %772 = vmatpush1.bf16.msra.mxu0 0
        %773 = vmatprep.subr.bf16.mxu0 0
        %774 = vmatpush1.bf16.msra.mxu0 0
        %775 = vmatprep.subr.bf16.mxu0 0
        %776 = vmatpush1.bf16.msra.mxu0 0
        %777 = vmatprep.subr.bf16.mxu0 0
        %778 = vmatpush1.bf16.msra.mxu0 0
        %779 = vmatprep.subr.bf16.mxu0 0
        %780 = vmatpush1.bf16.msra.mxu0 0
        %781 = vmatprep.subr.bf16.mxu0 0
        %782 = vmatpush1.bf16.msra.mxu0 0
        %783 = vmatprep.subr.bf16.mxu0 0
        %784 = vmatpush1.bf16.msra.mxu0 0
        %785 = vmatprep.subr.bf16.mxu0 0
        %786 = vmatpush1.bf16.msra.mxu0 0
        %787 = vmatprep.mubr.bf16.mxu0 0
        %788 = vmatmul.mubr.bf16.gmra.mrb[0].mxu0 %v753
        %v789 = vpop.f32.mrb[0].mxu0
        %v790 = vadd.f32 0.0, %v789
        %v791 = vpop.f32.mrb[0].mxu0
        %v792 = vpop.f32.mrb[0].mxu0
        %v793 = vpop.f32.mrb[0].mxu0
        %794 = vdwg.mxu0
        %795 = vrot.lane.b32.xlu0 %v655, 32
        %v796 = vpop.permute.xlu0 %795
        %v798 = vpack.c.bf16 %v796, %v796
        %v800 = vsel %vm474, %v798, 0
        %802 = vmatprep.subr.bf16.mxu0 0
        %803 = vmatpush1.bf16.msra.mxu0 %v472
        %804 = vmatprep.subr.bf16.mxu0 0
        %805 = vmatpush1.bf16.msra.mxu0 0
        %806 = vmatprep.subr.bf16.mxu0 0
        %807 = vmatpush1.bf16.msra.mxu0 0
        %808 = vmatprep.subr.bf16.mxu0 0
        %809 = vmatpush1.bf16.msra.mxu0 0
        %810 = vmatprep.subr.bf16.mxu0 0
        %811 = vmatpush1.bf16.msra.mxu0 0
        %812 = vmatprep.subr.bf16.mxu0 0
        %813 = vmatpush1.bf16.msra.mxu0 0
        %814 = vmatprep.subr.bf16.mxu0 0
        %815 = vmatpush1.bf16.msra.mxu0 0
        %816 = vmatprep.subr.bf16.mxu0 0
        %817 = vmatpush1.bf16.msra.mxu0 0
        %818 = vmatprep.subr.bf16.mxu0 0
        %819 = vmatpush1.bf16.msra.mxu0 0
        %820 = vmatprep.subr.bf16.mxu0 0
        %821 = vmatpush1.bf16.msra.mxu0 0
        %822 = vmatprep.subr.bf16.mxu0 0
        %823 = vmatpush1.bf16.msra.mxu0 0
        %824 = vmatprep.subr.bf16.mxu0 0
        %825 = vmatpush1.bf16.msra.mxu0 0
        %826 = vmatprep.subr.bf16.mxu0 0
        %827 = vmatpush1.bf16.msra.mxu0 0
        %828 = vmatprep.subr.bf16.mxu0 0
        %829 = vmatpush1.bf16.msra.mxu0 0
        %830 = vmatprep.subr.bf16.mxu0 0
        %831 = vmatpush1.bf16.msra.mxu0 0
        %832 = vmatprep.subr.bf16.mxu0 0
        %833 = vmatpush1.bf16.msra.mxu0 0
        %834 = vmatprep.mubr.bf16.mxu0 0
        %835 = vmatmul.mubr.bf16.gmra.mrb[0].mxu0 %v800
        %v836 = vpop.f32.mrb[0].mxu0
        %v837 = vadd.f32 0.0, %v836
        %v838 = vpop.f32.mrb[0].mxu0
        %v839 = vpop.f32.mrb[0].mxu0
        %v840 = vpop.f32.mrb[0].mxu0
        %841 = vdwg.mxu0
        %843 = vrot.lane.b32.xlu0 %v559, 8
        %v844 = vpop.permute.xlu0 %843
        %847 = vrot.lane.b32.xlu0 %v604, 16
        %v848 = vpop.permute.xlu0 %847
        %851 = vrot.lane.b32.xlu0 %v649, 24
        %v852 = vpop.permute.xlu0 %851
        %855 = vrot.lane.b32.xlu0 %v696, 32
        %v856 = vpop.permute.xlu0 %855
        %859 = vrot.lane.b32.xlu0 %v743, 40
        %v860 = vpop.permute.xlu0 %859
        %863 = vrot.lane.b32.xlu0 %v790, 48
        %v864 = vpop.permute.xlu0 %863
        %867 = vrot.lane.b32.xlu0 %v837, 56
        %v868 = vpop.permute.xlu0 %867
        %vm870 = vcmask 64512
        %v871 = vsel %vm870, %v513, %v844
        %v872 = vsel %vm474, %v871, %v848
        %vm873 = vcmask 195584
        %v874 = vsel %vm873, %v872, %v852
        %vm875 = vcmask 261120
        %v876 = vsel %vm875, %v874, %v856
        %vm877 = vcmask 326656
        %v878 = vsel %vm877, %v876, %v860
        %vm879 = vcmask 392192
        %v880 = vsel %vm879, %v878, %v864
        %vm881 = vcmask 457728
        %v882 = vsel %vm881, %v880, %v868
        %v883 = vld [vmem:[%s9] sm:$0xf]
        %v884 = vpack.c.bf16 %v882, %v882
        %v885 = vld [vmem:[%s5] sm:$0xf]
        %v886 = vld [vmem:[%s6] sm:$0xf]
        %vm887 = vcmask 1043456
        %v888 = vsel %vm887, %v449, 0.0
        %v889 = vsel %vm887, %v451, 0.0
        %v890 = vadd.f32 %v888, %v889
        %891 = vadd.xlane.f32.xlu0 %v890
        %v892 = vpop.xlane.xlu0 %891
        %v893 = vmul.f32 %v892, 0.00390625
        %v896 = vunpack.c.l.s4 839922192
        %v897 = vunpack.c.0.s8 %v896
        %v898 = vlaneseq
        %v899 = vshrl.u32 %v898, 7
        %v900 = vsub.s32 %v897, %v899
        %v901 = vrot.slane %v893, %v900
        %v903 = vsub.f32 %v449, %v901
        %v904 = vmul.f32 %v903, %v903
        %v906 = vcombine.high %v904, %v904
        %v908 = vsel %vm887, %v904, 0.0
        %v909 = vsel %vm887, %v906, 0.0
        %v910 = vadd.f32 %v908, %v909
        %911 = vadd.xlane.f32.xlu0 %v910
        %v912 = vpop.xlane.xlu0 %911
        %v913 = vmul.f32 %v912, 0.00390625
        %v914 = vadd.f32 %v913, 1e-05
        %v915 = vrsqrt.pop %v914
        %v916 = vmul.f32 %v885, %v915
        %918 = vset.pattern.permute.xlu0 0
        %919 = vperm.xlu0 %918, %v916
        %v920 = vpop.permute.xlu0 %919
        %v922 = vunpack.c.l.s4 839922192
        %v923 = vunpack.c.0.s8 %v922
        %v924 = vlaneseq
        %v925 = vshrl.u32 %v924, 7
        %v926 = vsub.s32 %v923, %v925
        %v927 = vrot.slane %v920, %v926
        %v929 = vmul.f32 %v903, %v927
        %931 = vset.pattern.permute.xlu0 0
        %932 = vperm.xlu0 %931, %v886
        %v933 = vpop.permute.xlu0 %932
        %v935 = vunpack.c.l.s4 839922192
        %v936 = vunpack.c.0.s8 %v935
        %v937 = vlaneseq
        %v938 = vshrl.u32 %v937, 7
        %v939 = vsub.s32 %v936, %v938
        %v940 = vrot.slane %v933, %v939
        %v942 = vadd.f32 %v929, %v940
        %v943 = vmul.f32 %v942, 0.2
        %v944 = vmax.f32 %v942, %v943
        %v946 = vcombine.high %v944, %v944
        %948 = vrot.lane.b32.xlu0 %v944, 17
        %v949 = vpop.permute.xlu0 %948
        %950 = vrot.lane.b32.xlu0 %v946, 17
        %v951 = vpop.permute.xlu0 %950
        %vm952 = vcmp.lt.s32.totalorder %v387, 17
        %v953 = vsel %vm952, %v949, %v951
        %v954 = vsel %vm952, %v951, %v949
        %v955 = vsel %vm417, 1, 0
        %v956 = vsel %vm418, 1, 0
        %vm957 = vcmp.eq.s32.totalorder %v955, 1
        %vm958 = vcmp.eq.s32.totalorder %v956, 1
        %v959 = vsel %vm957, %v954, 0.0
        %v960 = vsel %vm958, %v953, 0.0
        %v961 = vpack.c.bf16 %v959, %v959
        %v962 = vpack.c.bf16 %v960, %v960
        %963 = vrot.lane.b32.xlu0 %v944, 16
        %v964 = vpop.permute.xlu0 %963
        %965 = vrot.lane.b32.xlu0 %v946, 16
        %v966 = vpop.permute.xlu0 %965
        %vm967 = vcmp.lt.s32.totalorder %v387, 16
        %v968 = vsel %vm967, %v964, %v966
        %v969 = vsel %vm967, %v966, %v964
        %v970 = vsel %vm415, 1, 0
        %v971 = vsel %vm416, 1, 0
        %vm972 = vcmp.eq.s32.totalorder %v970, 1
        %vm973 = vcmp.eq.s32.totalorder %v971, 1
        %v974 = vsel %vm972, %v969, 0.0
        %v975 = vsel %vm973, %v968, 0.0
        %v976 = vpack.c.bf16 %v974, %v974
        %v977 = vpack.c.bf16 %v975, %v975
        %978 = vrot.lane.b32.xlu0 %v944, 15
        %v979 = vpop.permute.xlu0 %978
        %980 = vrot.lane.b32.xlu0 %v946, 15
        %v981 = vpop.permute.xlu0 %980
        %vm982 = vcmp.lt.s32.totalorder %v387, 15
        %v983 = vsel %vm982, %v979, %v981
        %v984 = vsel %vm982, %v981, %v979
        %v985 = vsel %vm421, 1, 0
        %v986 = vsel %vm422, 1, 0
        %vm987 = vcmp.eq.s32.totalorder %v985, 1
        %vm988 = vcmp.eq.s32.totalorder %v986, 1
        %v989 = vsel %vm987, %v984, 0.0
        %v990 = vsel %vm988, %v983, 0.0
        %v991 = vpack.c.bf16 %v989, %v989
        %v992 = vpack.c.bf16 %v990, %v990
        %993 = vrot.lane.b32.xlu0 %v944, 1
        %v994 = vpop.permute.xlu0 %993
        %995 = vrot.lane.b32.xlu0 %v946, 1
        %v996 = vpop.permute.xlu0 %995
        %vm997 = vcmp.lt.s32.totalorder %v387, 1
        %v998 = vsel %vm997, %v994, %v996
        %v999 = vsel %vm997, %v996, %v994
        %v1000 = vsel %vm413, 1, 0
        %v1001 = vsel %vm414, 1, 0
        %vm1002 = vcmp.eq.s32.totalorder %v1000, 1
        %vm1003 = vcmp.eq.s32.totalorder %v1001, 1
        %v1004 = vsel %vm1002, %v999, 0.0
        %v1005 = vsel %vm1003, %v998, 0.0
        %v1006 = vpack.c.bf16 %v1004, %v1004
        %v1007 = vpack.c.bf16 %v1005, %v1005
        %v1008 = vpack.c.bf16 %v944, %v944
        %v1009 = vpack.c.bf16 %v946, %v946
        %1010 = vrot.lane.b32.xlu0 %v944, 127
        %v1011 = vpop.permute.xlu0 %1010
        %1012 = vrot.lane.b32.xlu0 %v946, 127
        %v1013 = vpop.permute.xlu0 %1012
        %vm1014 = vcmp.lt.s32.totalorder %v387, 127
        %v1015 = vsel %vm1014, %v1011, %v1013
        %v1016 = vsel %vm1014, %v1013, %v1011
        %v1017 = vsel %vm419, 1, 0
        %v1018 = vsel %vm420, 1, 0
        %vm1019 = vcmp.eq.s32.totalorder %v1017, 1
        %vm1020 = vcmp.eq.s32.totalorder %v1018, 1
        %v1021 = vsel %vm1019, %v1015, 0.0
        %v1022 = vsel %vm1020, %v1016, 0.0
        %v1023 = vpack.c.bf16 %v1021, %v1021
        %v1024 = vpack.c.bf16 %v1022, %v1022
        %1025 = vrot.lane.b32.xlu0 %v944, 113
        %v1026 = vpop.permute.xlu0 %1025
        %1027 = vrot.lane.b32.xlu0 %v946, 113
        %v1028 = vpop.permute.xlu0 %1027
        %vm1029 = vcmp.lt.s32.totalorder %v387, 113
        %v1030 = vsel %vm1029, %v1026, %v1028
        %v1031 = vsel %vm1029, %v1028, %v1026
        %v1032 = vsel %vm425, 1, 0
        %v1033 = vsel %vm426, 1, 0
        %vm1034 = vcmp.eq.s32.totalorder %v1032, 1
        %vm1035 = vcmp.eq.s32.totalorder %v1033, 1
        %v1036 = vsel %vm1034, %v1030, 0.0
        %v1037 = vsel %vm1035, %v1031, 0.0
        %v1038 = vpack.c.bf16 %v1036, %v1036
        %v1039 = vpack.c.bf16 %v1037, %v1037
        %1040 = vrot.lane.b32.xlu0 %v944, 112
        %v1041 = vpop.permute.xlu0 %1040
        %1042 = vrot.lane.b32.xlu0 %v946, 112
        %v1043 = vpop.permute.xlu0 %1042
        %v1044 = vsel %vm457, %v1041, %v1043
        %v1045 = vsel %vm457, %v1043, %v1041
        %v1046 = vsel %vm423, 1, 0
        %v1047 = vsel %vm424, 1, 0
        %vm1048 = vcmp.eq.s32.totalorder %v1046, 1
        %vm1049 = vcmp.eq.s32.totalorder %v1047, 1
        %v1050 = vsel %vm1048, %v1044, 0.0
        %v1051 = vsel %vm1049, %v1045, 0.0
        %v1052 = vpack.c.bf16 %v1050, %v1050
        %v1053 = vpack.c.bf16 %v1051, %v1051
        %1054 = vrot.lane.b32.xlu0 %v944, 111
        %v1055 = vpop.permute.xlu0 %1054
        %1056 = vrot.lane.b32.xlu0 %v946, 111
        %v1057 = vpop.permute.xlu0 %1056
        %vm1058 = vcmp.lt.s32.totalorder %v387, 111
        %v1059 = vsel %vm1058, %v1055, %v1057
        %v1060 = vsel %vm1058, %v1057, %v1055
        %v1061 = vsel %vm427, 1, 0
        %v1062 = vsel %vm428, 1, 0
        %vm1063 = vcmp.eq.s32.totalorder %v1061, 1
        %vm1064 = vcmp.eq.s32.totalorder %v1062, 1
        %v1065 = vsel %vm1063, %v1059, 0.0
        %v1066 = vsel %vm1064, %v1060, 0.0
        %v1067 = vpack.c.bf16 %v1065, %v1065
        %v1068 = vpack.c.bf16 %v1066, %v1066
        %v1071 = vrot.slane %v976, 6
        %v1072 = vrot.slane %v977, 6
        %v1075 = vrot.slane %v991, 4
        %v1076 = vrot.slane %v992, 4
        %v1079 = vrot.slane %v1006, 2
        %v1080 = vrot.slane %v1007, 2
        %v1083 = vrot.slane %v1023, 6
        %v1084 = vrot.slane %v1024, 6
        %v1087 = vrot.slane %v1038, 4
        %v1088 = vrot.slane %v1039, 4
        %v1091 = vrot.slane %v1052, 2
        %v1092 = vrot.slane %v1053, 2
        %vm1093 = vcmask 1041408
        %v1096 = vsel %vm1093, %v961, %v1071
        %v1099 = vsel %vm1093, %v962, %v1072
        %v1101 = vsel %vm887, %v1096, %v1075
        %v1103 = vsel %vm887, %v1099, %v1076
        %vm1104 = vcmask 1045504
        %v1106 = vsel %vm1104, %v1101, %v1079
        %v1109 = vsel %vm1104, %v1103, %v1080
        %v1113 = vsel %vm1093, %v1008, %v1083
        %v1116 = vsel %vm1093, %v1009, %v1084
        %v1118 = vsel %vm887, %v1113, %v1087
        %v1120 = vsel %vm887, %v1116, %v1088
        %v1122 = vsel %vm1104, %v1118, %v1091
        %v1125 = vsel %vm1104, %v1120, %v1092
        %v1127 = vld [vmem:[%s1] sm:$0x3]
        %v1128 = vld [vmem:[%s2] sm:$0xf]
        %1130 = vset.pattern.permute.xlu0 0
        %1131 = vperm.xlu0 %1130, %v1128
        %v1132 = vpop.permute.xlu0 %1131
        %vm1134 = vcmask 293888
        %v1136 = vsel %vm1134, %v1127, 0
        %v1139 = vsel %vm1093, %v1067, 0
        %v1142 = vsel %vm1093, %v1068, 0
        %1144 = vmatprep.subr.bf16.mxu0 %v1109
        %1145 = vmatpush1.bf16.msra.mxu0 %v1106
        %1146 = vmatprep.subr.bf16.mxu0 %v1125
        %1147 = vmatpush1.bf16.msra.mxu0 %v1122
        %1148 = vmatprep.subr.bf16.mxu0 %v1142
        %1149 = vmatpush1.bf16.msra.mxu0 %v1139
        %1150 = vmatprep.subr.bf16.mxu0 0
        %1151 = vmatpush1.bf16.msra.mxu0 0
        %1152 = vmatprep.subr.bf16.mxu0 0
        %1153 = vmatpush1.bf16.msra.mxu0 0
        %1154 = vmatprep.subr.bf16.mxu0 0
        %1155 = vmatpush1.bf16.msra.mxu0 0
        %1156 = vmatprep.subr.bf16.mxu0 0
        %1157 = vmatpush1.bf16.msra.mxu0 0
        %1158 = vmatprep.subr.bf16.mxu0 0
        %1159 = vmatpush1.bf16.msra.mxu0 0
        %1160 = vmatprep.subr.bf16.mxu0 0
        %1161 = vmatpush1.bf16.msra.mxu0 0
        %1162 = vmatprep.subr.bf16.mxu0 0
        %1163 = vmatpush1.bf16.msra.mxu0 0
        %1164 = vmatprep.subr.bf16.mxu0 0
        %1165 = vmatpush1.bf16.msra.mxu0 0
        %1166 = vmatprep.subr.bf16.mxu0 0
        %1167 = vmatpush1.bf16.msra.mxu0 0
        %1168 = vmatprep.subr.bf16.mxu0 0
        %1169 = vmatpush1.bf16.msra.mxu0 0
        %1170 = vmatprep.subr.bf16.mxu0 0
        %1171 = vmatpush1.bf16.msra.mxu0 0
        %1172 = vmatprep.subr.bf16.mxu0 0
        %1173 = vmatpush1.bf16.msra.mxu0 0
        %1174 = vmatprep.subr.bf16.mxu0 0
        %1175 = vmatpush1.bf16.msra.mxu0 0
        %1176 = vmatprep.mubr.bf16.mxu0 0
        %1177 = vmatmul.mubr.bf16.gmra.mrb[0].mxu0 %v1136
        %v1178 = vpop.f32.mrb[0].mxu0
        %v1179 = vadd.f32 %v1132, %v1178
        %v1180 = vpop.f32.mrb[0].mxu0
        %v1181 = vadd.f32 %v1132, %v1180
        %v1182 = vpop.f32.mrb[0].mxu0
        %v1183 = vpop.f32.mrb[0].mxu0
        %1184 = vdwg.mxu0
        %1185 = vrot.lane.b32.xlu0 %v1179, 112
        %v1186 = vpop.permute.xlu0 %1185
        %1187 = vrot.lane.b32.xlu0 %v1181, 112
        %v1188 = vpop.permute.xlu0 %1187
        %v1189 = vsel %vm457, %v1186, %v1188
        %v1190 = vsel %vm457, %v1188, %v1186
        %v1191 = vadd.f32 %v1179, %v1189
        %v1192 = vadd.f32 %v1181, %v1190
        %v1193 = vpack.c.bf16 %v1191, %v1191
        %v1195 = vsel %vm474, %v1193, 0
        %1197 = vmatprep.subr.bf16.mxu0 0
        %1198 = vmatpush1.bf16.msra.mxu0 %v472
        %1199 = vmatprep.subr.bf16.mxu0 0
        %1200 = vmatpush1.bf16.msra.mxu0 0
        %1201 = vmatprep.subr.bf16.mxu0 0
        %1202 = vmatpush1.bf16.msra.mxu0 0
        %1203 = vmatprep.subr.bf16.mxu0 0
        %1204 = vmatpush1.bf16.msra.mxu0 0
        %1205 = vmatprep.subr.bf16.mxu0 0
        %1206 = vmatpush1.bf16.msra.mxu0 0
        %1207 = vmatprep.subr.bf16.mxu0 0
        %1208 = vmatpush1.bf16.msra.mxu0 0
        %1209 = vmatprep.subr.bf16.mxu0 0
        %1210 = vmatpush1.bf16.msra.mxu0 0
        %1211 = vmatprep.subr.bf16.mxu0 0
        %1212 = vmatpush1.bf16.msra.mxu0 0
        %1213 = vmatprep.subr.bf16.mxu0 0
        %1214 = vmatpush1.bf16.msra.mxu0 0
        %1215 = vmatprep.subr.bf16.mxu0 0
        %1216 = vmatpush1.bf16.msra.mxu0 0
        %1217 = vmatprep.subr.bf16.mxu0 0
        %1218 = vmatpush1.bf16.msra.mxu0 0
        %1219 = vmatprep.subr.bf16.mxu0 0
        %1220 = vmatpush1.bf16.msra.mxu0 0
        %1221 = vmatprep.subr.bf16.mxu0 0
        %1222 = vmatpush1.bf16.msra.mxu0 0
        %1223 = vmatprep.subr.bf16.mxu0 0
        %1224 = vmatpush1.bf16.msra.mxu0 0
        %1225 = vmatprep.subr.bf16.mxu0 0
        %1226 = vmatpush1.bf16.msra.mxu0 0
        %1227 = vmatprep.subr.bf16.mxu0 0
        %1228 = vmatpush1.bf16.msra.mxu0 0
        %1229 = vmatprep.mubr.bf16.mxu0 0
        %1230 = vmatmul.mubr.bf16.gmra.mrb[0].mxu0 %v1195
        %v1231 = vpop.f32.mrb[0].mxu0
        %v1232 = vadd.f32 0.0, %v1231
        %v1233 = vpop.f32.mrb[0].mxu0
        %v1234 = vpop.f32.mrb[0].mxu0
        %v1235 = vpop.f32.mrb[0].mxu0
        %1236 = vdwg.mxu0
        %1238 = vrot.lane.b32.xlu0 %v1193, 96
        %v1239 = vpop.permute.xlu0 %1238
        %v1241 = vsel %vm474, %v1239, 0
        %1243 = vmatprep.subr.bf16.mxu0 0
        %1244 = vmatpush1.bf16.msra.mxu0 %v472
        %1245 = vmatprep.subr.bf16.mxu0 0
        %1246 = vmatpush1.bf16.msra.mxu0 0
        %1247 = vmatprep.subr.bf16.mxu0 0
        %1248 = vmatpush1.bf16.msra.mxu0 0
        %1249 = vmatprep.subr.bf16.mxu0 0
        %1250 = vmatpush1.bf16.msra.mxu0 0
        %1251 = vmatprep.subr.bf16.mxu0 0
        %1252 = vmatpush1.bf16.msra.mxu0 0
        %1253 = vmatprep.subr.bf16.mxu0 0
        %1254 = vmatpush1.bf16.msra.mxu0 0
        %1255 = vmatprep.subr.bf16.mxu0 0
        %1256 = vmatpush1.bf16.msra.mxu0 0
        %1257 = vmatprep.subr.bf16.mxu0 0
        %1258 = vmatpush1.bf16.msra.mxu0 0
        %1259 = vmatprep.subr.bf16.mxu0 0
        %1260 = vmatpush1.bf16.msra.mxu0 0
        %1261 = vmatprep.subr.bf16.mxu0 0
        %1262 = vmatpush1.bf16.msra.mxu0 0
        %1263 = vmatprep.subr.bf16.mxu0 0
        %1264 = vmatpush1.bf16.msra.mxu0 0
        %1265 = vmatprep.subr.bf16.mxu0 0
        %1266 = vmatpush1.bf16.msra.mxu0 0
        %1267 = vmatprep.subr.bf16.mxu0 0
        %1268 = vmatpush1.bf16.msra.mxu0 0
        %1269 = vmatprep.subr.bf16.mxu0 0
        %1270 = vmatpush1.bf16.msra.mxu0 0
        %1271 = vmatprep.subr.bf16.mxu0 0
        %1272 = vmatpush1.bf16.msra.mxu0 0
        %1273 = vmatprep.subr.bf16.mxu0 0
        %1274 = vmatpush1.bf16.msra.mxu0 0
        %1275 = vmatprep.mubr.bf16.mxu0 0
        %1276 = vmatmul.mubr.bf16.gmra.mrb[0].mxu0 %v1241
        %v1277 = vpop.f32.mrb[0].mxu0
        %v1278 = vadd.f32 0.0, %v1277
        %v1279 = vpop.f32.mrb[0].mxu0
        %v1280 = vpop.f32.mrb[0].mxu0
        %v1281 = vpop.f32.mrb[0].mxu0
        %1282 = vdwg.mxu0
        %1283 = vrot.lane.b32.xlu0 %v1193, 64
        %v1284 = vpop.permute.xlu0 %1283
        %v1286 = vsel %vm474, %v1284, 0
        %1288 = vmatprep.subr.bf16.mxu0 0
        %1289 = vmatpush1.bf16.msra.mxu0 %v472
        %1290 = vmatprep.subr.bf16.mxu0 0
        %1291 = vmatpush1.bf16.msra.mxu0 0
        %1292 = vmatprep.subr.bf16.mxu0 0
        %1293 = vmatpush1.bf16.msra.mxu0 0
        %1294 = vmatprep.subr.bf16.mxu0 0
        %1295 = vmatpush1.bf16.msra.mxu0 0
        %1296 = vmatprep.subr.bf16.mxu0 0
        %1297 = vmatpush1.bf16.msra.mxu0 0
        %1298 = vmatprep.subr.bf16.mxu0 0
        %1299 = vmatpush1.bf16.msra.mxu0 0
        %1300 = vmatprep.subr.bf16.mxu0 0
        %1301 = vmatpush1.bf16.msra.mxu0 0
        %1302 = vmatprep.subr.bf16.mxu0 0
        %1303 = vmatpush1.bf16.msra.mxu0 0
        %1304 = vmatprep.subr.bf16.mxu0 0
        %1305 = vmatpush1.bf16.msra.mxu0 0
        %1306 = vmatprep.subr.bf16.mxu0 0
        %1307 = vmatpush1.bf16.msra.mxu0 0
        %1308 = vmatprep.subr.bf16.mxu0 0
        %1309 = vmatpush1.bf16.msra.mxu0 0
        %1310 = vmatprep.subr.bf16.mxu0 0
        %1311 = vmatpush1.bf16.msra.mxu0 0
        %1312 = vmatprep.subr.bf16.mxu0 0
        %1313 = vmatpush1.bf16.msra.mxu0 0
        %1314 = vmatprep.subr.bf16.mxu0 0
        %1315 = vmatpush1.bf16.msra.mxu0 0
        %1316 = vmatprep.subr.bf16.mxu0 0
        %1317 = vmatpush1.bf16.msra.mxu0 0
        %1318 = vmatprep.subr.bf16.mxu0 0
        %1319 = vmatpush1.bf16.msra.mxu0 0
        %1320 = vmatprep.mubr.bf16.mxu0 0
        %1321 = vmatmul.mubr.bf16.gmra.mrb[0].mxu0 %v1286
        %v1322 = vpop.f32.mrb[0].mxu0
        %v1323 = vadd.f32 0.0, %v1322
        %v1324 = vpop.f32.mrb[0].mxu0
        %v1325 = vpop.f32.mrb[0].mxu0
        %v1326 = vpop.f32.mrb[0].mxu0
        %1327 = vdwg.mxu0
        %1328 = vrot.lane.b32.xlu0 %v1193, 32
        %v1329 = vpop.permute.xlu0 %1328
        %v1331 = vsel %vm474, %v1329, 0
        %1333 = vmatprep.subr.bf16.mxu0 0
        %1334 = vmatpush1.bf16.msra.mxu0 %v472
        %1335 = vmatprep.subr.bf16.mxu0 0
        %1336 = vmatpush1.bf16.msra.mxu0 0
        %1337 = vmatprep.subr.bf16.mxu0 0
        %1338 = vmatpush1.bf16.msra.mxu0 0
        %1339 = vmatprep.subr.bf16.mxu0 0
        %1340 = vmatpush1.bf16.msra.mxu0 0
        %1341 = vmatprep.subr.bf16.mxu0 0
        %1342 = vmatpush1.bf16.msra.mxu0 0
        %1343 = vmatprep.subr.bf16.mxu0 0
        %1344 = vmatpush1.bf16.msra.mxu0 0
        %1345 = vmatprep.subr.bf16.mxu0 0
        %1346 = vmatpush1.bf16.msra.mxu0 0
        %1347 = vmatprep.subr.bf16.mxu0 0
        %1348 = vmatpush1.bf16.msra.mxu0 0
        %1349 = vmatprep.subr.bf16.mxu0 0
        %1350 = vmatpush1.bf16.msra.mxu0 0
        %1351 = vmatprep.subr.bf16.mxu0 0
        %1352 = vmatpush1.bf16.msra.mxu0 0
        %1353 = vmatprep.subr.bf16.mxu0 0
        %1354 = vmatpush1.bf16.msra.mxu0 0
        %1355 = vmatprep.subr.bf16.mxu0 0
        %1356 = vmatpush1.bf16.msra.mxu0 0
        %1357 = vmatprep.subr.bf16.mxu0 0
        %1358 = vmatpush1.bf16.msra.mxu0 0
        %1359 = vmatprep.subr.bf16.mxu0 0
        %1360 = vmatpush1.bf16.msra.mxu0 0
        %1361 = vmatprep.subr.bf16.mxu0 0
        %1362 = vmatpush1.bf16.msra.mxu0 0
        %1363 = vmatprep.subr.bf16.mxu0 0
        %1364 = vmatpush1.bf16.msra.mxu0 0
        %1365 = vmatprep.mubr.bf16.mxu0 0
        %1366 = vmatmul.mubr.bf16.gmra.mrb[0].mxu0 %v1331
        %v1367 = vpop.f32.mrb[0].mxu0
        %v1368 = vadd.f32 0.0, %v1367
        %v1369 = vpop.f32.mrb[0].mxu0
        %v1370 = vpop.f32.mrb[0].mxu0
        %v1371 = vpop.f32.mrb[0].mxu0
        %1372 = vdwg.mxu0
        %v1373 = vpack.c.bf16 %v1192, %v1192
        %v1375 = vsel %vm474, %v1373, 0
        %1377 = vmatprep.subr.bf16.mxu0 0
        %1378 = vmatpush1.bf16.msra.mxu0 %v472
        %1379 = vmatprep.subr.bf16.mxu0 0
        %1380 = vmatpush1.bf16.msra.mxu0 0
        %1381 = vmatprep.subr.bf16.mxu0 0
        %1382 = vmatpush1.bf16.msra.mxu0 0
        %1383 = vmatprep.subr.bf16.mxu0 0
        %1384 = vmatpush1.bf16.msra.mxu0 0
        %1385 = vmatprep.subr.bf16.mxu0 0
        %1386 = vmatpush1.bf16.msra.mxu0 0
        %1387 = vmatprep.subr.bf16.mxu0 0
        %1388 = vmatpush1.bf16.msra.mxu0 0
        %1389 = vmatprep.subr.bf16.mxu0 0
        %1390 = vmatpush1.bf16.msra.mxu0 0
        %1391 = vmatprep.subr.bf16.mxu0 0
        %1392 = vmatpush1.bf16.msra.mxu0 0
        %1393 = vmatprep.subr.bf16.mxu0 0
        %1394 = vmatpush1.bf16.msra.mxu0 0
        %1395 = vmatprep.subr.bf16.mxu0 0
        %1396 = vmatpush1.bf16.msra.mxu0 0
        %1397 = vmatprep.subr.bf16.mxu0 0
        %1398 = vmatpush1.bf16.msra.mxu0 0
        %1399 = vmatprep.subr.bf16.mxu0 0
        %1400 = vmatpush1.bf16.msra.mxu0 0
        %1401 = vmatprep.subr.bf16.mxu0 0
        %1402 = vmatpush1.bf16.msra.mxu0 0
        %1403 = vmatprep.subr.bf16.mxu0 0
        %1404 = vmatpush1.bf16.msra.mxu0 0
        %1405 = vmatprep.subr.bf16.mxu0 0
        %1406 = vmatpush1.bf16.msra.mxu0 0
        %1407 = vmatprep.subr.bf16.mxu0 0
        %1408 = vmatpush1.bf16.msra.mxu0 0
        %1409 = vmatprep.mubr.bf16.mxu0 0
        %1410 = vmatmul.mubr.bf16.gmra.mrb[0].mxu0 %v1375
        %v1411 = vpop.f32.mrb[0].mxu0
        %v1412 = vadd.f32 0.0, %v1411
        %v1413 = vpop.f32.mrb[0].mxu0
        %v1414 = vpop.f32.mrb[0].mxu0
        %v1415 = vpop.f32.mrb[0].mxu0
        %1416 = vdwg.mxu0
        %1418 = vrot.lane.b32.xlu0 %v1373, 96
        %v1419 = vpop.permute.xlu0 %1418
        %v1421 = vsel %vm474, %v1419, 0
        %1423 = vmatprep.subr.bf16.mxu0 0
        %1424 = vmatpush1.bf16.msra.mxu0 %v472
        %1425 = vmatprep.subr.bf16.mxu0 0
        %1426 = vmatpush1.bf16.msra.mxu0 0
        %1427 = vmatprep.subr.bf16.mxu0 0
        %1428 = vmatpush1.bf16.msra.mxu0 0
        %1429 = vmatprep.subr.bf16.mxu0 0
        %1430 = vmatpush1.bf16.msra.mxu0 0
        %1431 = vmatprep.subr.bf16.mxu0 0
        %1432 = vmatpush1.bf16.msra.mxu0 0
        %1433 = vmatprep.subr.bf16.mxu0 0
        %1434 = vmatpush1.bf16.msra.mxu0 0
        %1435 = vmatprep.subr.bf16.mxu0 0
        %1436 = vmatpush1.bf16.msra.mxu0 0
        %1437 = vmatprep.subr.bf16.mxu0 0
        %1438 = vmatpush1.bf16.msra.mxu0 0
        %1439 = vmatprep.subr.bf16.mxu0 0
        %1440 = vmatpush1.bf16.msra.mxu0 0
        %1441 = vmatprep.subr.bf16.mxu0 0
        %1442 = vmatpush1.bf16.msra.mxu0 0
        %1443 = vmatprep.subr.bf16.mxu0 0
        %1444 = vmatpush1.bf16.msra.mxu0 0
        %1445 = vmatprep.subr.bf16.mxu0 0
        %1446 = vmatpush1.bf16.msra.mxu0 0
        %1447 = vmatprep.subr.bf16.mxu0 0
        %1448 = vmatpush1.bf16.msra.mxu0 0
        %1449 = vmatprep.subr.bf16.mxu0 0
        %1450 = vmatpush1.bf16.msra.mxu0 0
        %1451 = vmatprep.subr.bf16.mxu0 0
        %1452 = vmatpush1.bf16.msra.mxu0 0
        %1453 = vmatprep.subr.bf16.mxu0 0
        %1454 = vmatpush1.bf16.msra.mxu0 0
        %1455 = vmatprep.mubr.bf16.mxu0 0
        %1456 = vmatmul.mubr.bf16.gmra.mrb[0].mxu0 %v1421
        %v1457 = vpop.f32.mrb[0].mxu0
        %v1458 = vadd.f32 0.0, %v1457
        %v1459 = vpop.f32.mrb[0].mxu0
        %v1460 = vpop.f32.mrb[0].mxu0
        %v1461 = vpop.f32.mrb[0].mxu0
        %1462 = vdwg.mxu0
        %1463 = vrot.lane.b32.xlu0 %v1373, 64
        %v1464 = vpop.permute.xlu0 %1463
        %v1466 = vsel %vm474, %v1464, 0
        %1468 = vmatprep.subr.bf16.mxu0 0
        %1469 = vmatpush1.bf16.msra.mxu0 %v472
        %1470 = vmatprep.subr.bf16.mxu0 0
        %1471 = vmatpush1.bf16.msra.mxu0 0
        %1472 = vmatprep.subr.bf16.mxu0 0
        %1473 = vmatpush1.bf16.msra.mxu0 0
        %1474 = vmatprep.subr.bf16.mxu0 0
        %1475 = vmatpush1.bf16.msra.mxu0 0
        %1476 = vmatprep.subr.bf16.mxu0 0
        %1477 = vmatpush1.bf16.msra.mxu0 0
        %1478 = vmatprep.subr.bf16.mxu0 0
        %1479 = vmatpush1.bf16.msra.mxu0 0
        %1480 = vmatprep.subr.bf16.mxu0 0
        %1481 = vmatpush1.bf16.msra.mxu0 0
        %1482 = vmatprep.subr.bf16.mxu0 0
        %1483 = vmatpush1.bf16.msra.mxu0 0
        %1484 = vmatprep.subr.bf16.mxu0 0
        %1485 = vmatpush1.bf16.msra.mxu0 0
        %1486 = vmatprep.subr.bf16.mxu0 0
        %1487 = vmatpush1.bf16.msra.mxu0 0
        %1488 = vmatprep.subr.bf16.mxu0 0
        %1489 = vmatpush1.bf16.msra.mxu0 0
        %1490 = vmatprep.subr.bf16.mxu0 0
        %1491 = vmatpush1.bf16.msra.mxu0 0
        %1492 = vmatprep.subr.bf16.mxu0 0
        %1493 = vmatpush1.bf16.msra.mxu0 0
        %1494 = vmatprep.subr.bf16.mxu0 0
        %1495 = vmatpush1.bf16.msra.mxu0 0
        %1496 = vmatprep.subr.bf16.mxu0 0
        %1497 = vmatpush1.bf16.msra.mxu0 0
        %1498 = vmatprep.subr.bf16.mxu0 0
        %1499 = vmatpush1.bf16.msra.mxu0 0
        %1500 = vmatprep.mubr.bf16.mxu0 0
        %1501 = vmatmul.mubr.bf16.gmra.mrb[0].mxu0 %v1466
        %v1502 = vpop.f32.mrb[0].mxu0
        %v1503 = vadd.f32 0.0, %v1502
        %v1504 = vpop.f32.mrb[0].mxu0
        %v1505 = vpop.f32.mrb[0].mxu0
        %v1506 = vpop.f32.mrb[0].mxu0
        %1507 = vdwg.mxu0
        %1508 = vrot.lane.b32.xlu0 %v1373, 32
        %v1509 = vpop.permute.xlu0 %1508
        %v1511 = vsel %vm474, %v1509, 0
        %1513 = vmatprep.subr.bf16.mxu0 0
        %1514 = vmatpush1.bf16.msra.mxu0 %v472
        %1515 = vmatprep.subr.bf16.mxu0 0
        %1516 = vmatpush1.bf16.msra.mxu0 0
        %1517 = vmatprep.subr.bf16.mxu0 0
        %1518 = vmatpush1.bf16.msra.mxu0 0
        %1519 = vmatprep.subr.bf16.mxu0 0
        %1520 = vmatpush1.bf16.msra.mxu0 0
        %1521 = vmatprep.subr.bf16.mxu0 0
        %1522 = vmatpush1.bf16.msra.mxu0 0
        %1523 = vmatprep.subr.bf16.mxu0 0
        %1524 = vmatpush1.bf16.msra.mxu0 0
        %1525 = vmatprep.subr.bf16.mxu0 0
        %1526 = vmatpush1.bf16.msra.mxu0 0
        %1527 = vmatprep.subr.bf16.mxu0 0
        %1528 = vmatpush1.bf16.msra.mxu0 0
        %1529 = vmatprep.subr.bf16.mxu0 0
        %1530 = vmatpush1.bf16.msra.mxu0 0
        %1531 = vmatprep.subr.bf16.mxu0 0
        %1532 = vmatpush1.bf16.msra.mxu0 0
        %1533 = vmatprep.subr.bf16.mxu0 0
        %1534 = vmatpush1.bf16.msra.mxu0 0
        %1535 = vmatprep.subr.bf16.mxu0 0
        %1536 = vmatpush1.bf16.msra.mxu0 0
        %1537 = vmatprep.subr.bf16.mxu0 0
        %1538 = vmatpush1.bf16.msra.mxu0 0
        %1539 = vmatprep.subr.bf16.mxu0 0
        %1540 = vmatpush1.bf16.msra.mxu0 0
        %1541 = vmatprep.subr.bf16.mxu0 0
        %1542 = vmatpush1.bf16.msra.mxu0 0
        %1543 = vmatprep.subr.bf16.mxu0 0
        %1544 = vmatpush1.bf16.msra.mxu0 0
        %1545 = vmatprep.mubr.bf16.mxu0 0
        %1546 = vmatmul.mubr.bf16.gmra.mrb[0].mxu0 %v1511
        %v1547 = vpop.f32.mrb[0].mxu0
        %v1548 = vadd.f32 0.0, %v1547
        %v1549 = vpop.f32.mrb[0].mxu0
        %v1550 = vpop.f32.mrb[0].mxu0
        %v1551 = vpop.f32.mrb[0].mxu0
        %1552 = vdwg.mxu0
        %1554 = vrot.lane.b32.xlu0 %v1278, 8
        %v1555 = vpop.permute.xlu0 %1554
        %1558 = vrot.lane.b32.xlu0 %v1323, 16
        %v1559 = vpop.permute.xlu0 %1558
        %1562 = vrot.lane.b32.xlu0 %v1368, 24
        %v1563 = vpop.permute.xlu0 %1562
        %1566 = vrot.lane.b32.xlu0 %v1412, 32
        %v1567 = vpop.permute.xlu0 %1566
        %1570 = vrot.lane.b32.xlu0 %v1458, 40
        %v1571 = vpop.permute.xlu0 %1570
        %1574 = vrot.lane.b32.xlu0 %v1503, 48
        %v1575 = vpop.permute.xlu0 %1574
        %1578 = vrot.lane.b32.xlu0 %v1548, 56
        %v1579 = vpop.permute.xlu0 %1578
        %v1581 = vsel %vm870, %v1232, %v1555
        %v1582 = vsel %vm474, %v1581, %v1559
        %v1583 = vsel %vm873, %v1582, %v1563
        %v1584 = vsel %vm875, %v1583, %v1567
        %v1585 = vsel %vm877, %v1584, %v1571
        %v1586 = vsel %vm879, %v1585, %v1575
        %v1587 = vsel %vm881, %v1586, %v1579
        %v1588 = vld [vmem:[%s7] sm:$0xf]
        %v1589 = vld [vmem:[%s8] sm:$0xf]
        %vm1590 = vcmask 519168
        %v1591 = vsel %vm1590, %v1587, 0.0
        %1592 = vadd.xlane.f32.xlu0 %v1591
        %v1593 = vpop.xlane.xlu0 %1592
        %v1594 = vmul.f32 %v1593, 0.015625
        %v1595 = vsub.f32 %v1587, %v1594
        %v1596 = vmul.f32 %v1595, %v1595
        %v1597 = vsel %vm1590, %v1596, 0.0
        %1598 = vadd.xlane.f32.xlu0 %v1597
        %v1599 = vpop.xlane.xlu0 %1598
        %v1600 = vmul.f32 %v1599, 0.015625
        %v1601 = vadd.f32 %v1600, 1e-05
        %v1602 = vrsqrt.pop %v1601
        %v1603 = vmul.f32 %v1588, %v1602
        %1605 = vset.pattern.permute.xlu0 0
        %1606 = vperm.xlu0 %1605, %v1603
        %v1607 = vpop.permute.xlu0 %1606
        %v1609 = vmul.f32 %v1595, %v1607
        %1611 = vset.pattern.permute.xlu0 0
        %1612 = vperm.xlu0 %1611, %v1589
        %v1613 = vpop.permute.xlu0 %1612
        %v1615 = vadd.f32 %v1609, %v1613
        %v1616 = vmul.f32 %v1615, 0.2
        %v1617 = vmax.f32 %v1615, %v1616
        %vm1618 = vcmask 1048064
        %1619 = vrot.lane.b32.xlu0 %v1617, 64
        %v1620 = vpop.permute.xlu0 %1619
        %v1621 = vsel %vm1618, %v1620, %v1617
        %1622 = vrot.lane.b32.xlu0 %v1621, 64
        %v1623 = vpop.permute.xlu0 %1622
        %v1624 = vsel %vm1618, %v1623, %v1617
        %v1625 = vsel %vm443, 1, 0
        %vm1626 = vcmp.eq.s32.totalorder %v1625, 1
        %1628 = vrot.lane.b32.xlu0 %v1624, 73
        %v1629 = vpop.permute.xlu0 %1628
        %v1631 = vsel %vm1626, %v1629, 0.0
        %v1632 = vpack.c.bf16 %v1631, %v1631
        %v1633 = vsel %vm442, 1, 0
        %vm1634 = vcmp.eq.s32.totalorder %v1633, 1
        %1635 = vrot.lane.b32.xlu0 %v1624, 72
        %v1636 = vpop.permute.xlu0 %1635
        %v1638 = vsel %vm1634, %v1636, 0.0
        %v1639 = vpack.c.bf16 %v1638, %v1638
        %v1640 = vsel %vm445, 1, 0
        %vm1641 = vcmp.eq.s32.totalorder %v1640, 1
        %1642 = vrot.lane.b32.xlu0 %v1624, 71
        %v1643 = vpop.permute.xlu0 %1642
        %v1645 = vsel %vm1641, %v1643, 0.0
        %v1646 = vpack.c.bf16 %v1645, %v1645
        %v1647 = vsel %vm441, 1, 0
        %vm1648 = vcmp.eq.s32.totalorder %v1647, 1
        %1649 = vrot.lane.b32.xlu0 %v1624, 65
        %v1650 = vpop.permute.xlu0 %1649
        %v1652 = vsel %vm1648, %v1650, 0.0
        %v1653 = vpack.c.bf16 %v1652, %v1652
        %v1654 = vpack.c.bf16 %v1617, %v1617
        %v1655 = vsel %vm444, 1, 0
        %vm1656 = vcmp.eq.s32.totalorder %v1655, 1
        %1657 = vrot.lane.b32.xlu0 %v1624, 127
        %v1658 = vpop.permute.xlu0 %1657
        %v1660 = vsel %vm1656, %v1658, 0.0
        %v1661 = vpack.c.bf16 %v1660, %v1660
        %v1662 = vsel %vm447, 1, 0
        %vm1663 = vcmp.eq.s32.totalorder %v1662, 1
        %1664 = vrot.lane.b32.xlu0 %v1624, 121
        %v1665 = vpop.permute.xlu0 %1664
        %v1667 = vsel %vm1663, %v1665, 0.0
        %v1668 = vpack.c.bf16 %v1667, %v1667
        %v1669 = vsel %vm446, 1, 0
        %vm1670 = vcmp.eq.s32.totalorder %v1669, 1
        %1671 = vrot.lane.b32.xlu0 %v1624, 120
        %v1672 = vpop.permute.xlu0 %1671
        %v1674 = vsel %vm1670, %v1672, 0.0
        %v1675 = vpack.c.bf16 %v1674, %v1674
        %v1676 = vsel %vm448, 1, 0
        %vm1677 = vcmp.eq.s32.totalorder %v1676, 1
        %1678 = vrot.lane.b32.xlu0 %v1624, 119
        %v1679 = vpop.permute.xlu0 %1678
        %v1681 = vsel %vm1677, %v1679, 0.0
        %v1682 = vpack.c.bf16 %v1681, %v1681
        %v1684 = vrot.slane %v1639, 6
        %v1686 = vrot.slane %v1646, 4
        %v1688 = vrot.slane %v1653, 2
        %v1690 = vrot.slane %v1661, 6
        %v1692 = vrot.slane %v1668, 4
        %v1694 = vrot.slane %v1675, 2
        %v1697 = vsel %vm1093, %v1632, %v1684
        %v1699 = vsel %vm887, %v1697, %v1686
        %v1701 = vsel %vm1104, %v1699, %v1688
        %v1705 = vsel %vm1093, %v1654, %v1690
        %v1707 = vsel %vm887, %v1705, %v1692
        %v1709 = vsel %vm1104, %v1707, %v1694
        %v1711 = vld [vmem:[%s3] sm:$0xf]
        %v1712 = vld [vmem:[%s4] sm:$0xff]
        %1714 = vset.pattern.permute.xlu0 0
        %1715 = vperm.xlu0 %1714, %v1712
        %v1716 = vpop.permute.xlu0 %1715
        %v1719 = vsel %vm1134, %v1711, 0
        %v1722 = vsel %vm1093, %v1682, 0
        %1724 = vmatprep.subr.bf16.mxu0 0
        %1725 = vmatpush1.bf16.msra.mxu0 %v1701
        %1726 = vmatprep.subr.bf16.mxu0 0
        %1727 = vmatpush1.bf16.msra.mxu0 %v1709
        %1728 = vmatprep.subr.bf16.mxu0 0
        %1729 = vmatpush1.bf16.msra.mxu0 %v1722
        %1730 = vmatprep.subr.bf16.mxu0 0
        %1731 = vmatpush1.bf16.msra.mxu0 0
        %1732 = vmatprep.subr.bf16.mxu0 0
        %1733 = vmatpush1.bf16.msra.mxu0 0
        %1734 = vmatprep.subr.bf16.mxu0 0
        %1735 = vmatpush1.bf16.msra.mxu0 0
        %1736 = vmatprep.subr.bf16.mxu0 0
        %1737 = vmatpush1.bf16.msra.mxu0 0
        %1738 = vmatprep.subr.bf16.mxu0 0
        %1739 = vmatpush1.bf16.msra.mxu0 0
        %1740 = vmatprep.subr.bf16.mxu0 0
        %1741 = vmatpush1.bf16.msra.mxu0 0
        %1742 = vmatprep.subr.bf16.mxu0 0
        %1743 = vmatpush1.bf16.msra.mxu0 0
        %1744 = vmatprep.subr.bf16.mxu0 0
        %1745 = vmatpush1.bf16.msra.mxu0 0
        %1746 = vmatprep.subr.bf16.mxu0 0
        %1747 = vmatpush1.bf16.msra.mxu0 0
        %1748 = vmatprep.subr.bf16.mxu0 0
        %1749 = vmatpush1.bf16.msra.mxu0 0
        %1750 = vmatprep.subr.bf16.mxu0 0
        %1751 = vmatpush1.bf16.msra.mxu0 0
        %1752 = vmatprep.subr.bf16.mxu0 0
        %1753 = vmatpush1.bf16.msra.mxu0 0
        %1754 = vmatprep.subr.bf16.mxu0 0
        %1755 = vmatpush1.bf16.msra.mxu0 0
        %1756 = vmatprep.mubr.bf16.mxu0 0
        %1757 = vmatmul.mubr.bf16.gmra.mrb[0].mxu0 %v1719
        %v1758 = vpop.f32.mrb[0].mxu0
        %v1759 = vadd.f32 %v1716, %v1758
        %v1760 = vpop.f32.mrb[0].mxu0
        %v1761 = vpop.f32.mrb[0].mxu0
        %v1762 = vpop.f32.mrb[0].mxu0
        %1763 = vdwg.mxu0
        %vm1764 = vcmask 31744
        %v1766 = vsel %vm1764, %v883, 0
        %v1769 = vsel %vm1093, %v884, 0
        %1771 = vmatprep.subr.bf16.mxu0 0
        %1772 = vmatpush1.bf16.msra.mxu0 %v1769
        %1773 = vmatprep.subr.bf16.mxu0 0
        %1774 = vmatpush1.bf16.msra.mxu0 0
        %1775 = vmatprep.subr.bf16.mxu0 0
        %1776 = vmatpush1.bf16.msra.mxu0 0
        %1777 = vmatprep.subr.bf16.mxu0 0
        %1778 = vmatpush1.bf16.msra.mxu0 0
        %1779 = vmatprep.subr.bf16.mxu0 0
        %1780 = vmatpush1.bf16.msra.mxu0 0
        %1781 = vmatprep.subr.bf16.mxu0 0
        %1782 = vmatpush1.bf16.msra.mxu0 0
        %1783 = vmatprep.subr.bf16.mxu0 0
        %1784 = vmatpush1.bf16.msra.mxu0 0
        %1785 = vmatprep.subr.bf16.mxu0 0
        %1786 = vmatpush1.bf16.msra.mxu0 0
        %1787 = vmatprep.subr.bf16.mxu0 0
        %1788 = vmatpush1.bf16.msra.mxu0 0
        %1789 = vmatprep.subr.bf16.mxu0 0
        %1790 = vmatpush1.bf16.msra.mxu0 0
        %1791 = vmatprep.subr.bf16.mxu0 0
        %1792 = vmatpush1.bf16.msra.mxu0 0
        %1793 = vmatprep.subr.bf16.mxu0 0
        %1794 = vmatpush1.bf16.msra.mxu0 0
        %1795 = vmatprep.subr.bf16.mxu0 0
        %1796 = vmatpush1.bf16.msra.mxu0 0
        %1797 = vmatprep.subr.bf16.mxu0 0
        %1798 = vmatpush1.bf16.msra.mxu0 0
        %1799 = vmatprep.subr.bf16.mxu0 0
        %1800 = vmatpush1.bf16.msra.mxu0 0
        %1801 = vmatprep.subr.bf16.mxu0 0
        %1802 = vmatpush1.bf16.msra.mxu0 0
        %1803 = vmatprep.mubr.bf16.mxu0 0
        %1804 = vmatmul.mubr.bf16.gmra.mrb[0].mxu0 %v1766
        %v1805 = vpop.f32.mrb[0].mxu0
        %v1806 = vadd.f32 %v1759, %v1805
        %v1807 = vpop.f32.mrb[0].mxu0
        %v1808 = vpop.f32.mrb[0].mxu0
        %v1809 = vpop.f32.mrb[0].mxu0
        %1810 = vdwg.mxu0
        %v1811 = vmul.f32 %v1806, 0.70710677
        %vm1812 = vcmask 523264
        %1813 = vst.msk [vmem:[%s379] sm:$0xff] %vm1812, %v1811
        %s1814 = sand.u32 %s269, 1
        %s1815 = scalar_lea.sflag [#allocation3], %s1814
        %s1816 = sand.u32 %s269, 1
        %s1817 = smul.addr %s1816, 8
        %s1818 = scalar_lea.vmem [#allocation2], %s1817
        // Predicated region
        $region65: #{tpu_custom_call.1} parent=63 // pred_check
          %p1819 = pneg %p279
        $region66: #{tpu_custom_call.1} parent=63 // pred_check_branch
          %1821 = sbr.rel (%p1819) target = $region68
        $region67: #{tpu_custom_call.1} parent=63 // pred_region
          %s1823 = ssub.s32 128, 128
          %1824 = vsyncadd %s1815, %s1823
          %s1825 = smul.addr %s25, 128
          %s1826 = scalar_lea.hbm %s11, %s1825
          %s1828 = sshll.u32 %s1818, 4
          %s1829 = int_to_ptr.vmem [resolvable:$true] %s1828
          %1831 = dma.vmem_to_hbm [thread:$0]  %s1829, 128, %s1826, %s1815
        $region68: #{tpu_custom_call.1} parent=63 // pred_fallthru
          _
      $region64: #{tpu_custom_call.1} parent=5 // pred_fallthru
        _
      %p1832 = scmp.le.s32.totalorder 2, %s20
      // Predicated region
      $region69: #{tpu_custom_call.1} parent=5 // pred_check
        %p1833 = pneg %p1832
      $region70: #{tpu_custom_call.1} parent=5 // pred_check_branch
        %1835 = sbr.rel (%p1833) target = $region72
      $region71: #{tpu_custom_call.1} parent=5 // pred_region
        %s1836 = ssub.s32 %s20, 2
        // Predicated region
        $region73: #{tpu_custom_call.1} parent=71 // pred_check
          %p1837 = pneg %p285
        $region74: #{tpu_custom_call.1} parent=71 // pred_check_branch
          %1839 = sbr.rel (%p1837) target = $region76
        $region75: #{tpu_custom_call.1} parent=71 // pred_region
          %s1840 = sand.u32 %s270, 1
          %s1841 = scalar_lea.sflag [#allocation3], %s1840
          %s1842 = sand.u32 %s270, 1
          %s1843 = smul.addr %s1842, 8
          %s1844 = scalar_lea.vmem [#allocation2], %s1843
          %1845 = dma.done %s1841, 128
        $region76: #{tpu_custom_call.1} parent=71 // pred_fallthru
          _
      $region72: #{tpu_custom_call.1} parent=5 // pred_fallthru
        _
    $region6: #{tpu_custom_call.1} parent=1 // loop_footer
      %s24 = sadd.s32 1, %s20
    $region7: #{tpu_custom_call.1} parent=1 // loop_footer_branch
      %19 = sbr.rel target = $region3
    $region8: #{tpu_custom_call.1} parent=1 // loop_exit
      _
    %1846 = vsyncpa [#allocation3], 1
    %s1847 = scalar_lea.sflag [#allocation3], 1
    %1848 = vsyncpa %s1847, 1

</llo_original>
